<compile_context>
chip_gen: v6e
topology: v6e:2x2x1
jax: 0.10.0
libtpu: 0.0.40
codegen_flags: <defaults>
</compile_context>

<pallas_src>
import functools

import jax
import jax.numpy as jnp
from jax.experimental import pallas as pl
from jax.experimental.pallas import tpu as pltpu

EPS = 1e-5  # nn.GroupNorm default


def _round_up(x, m):
    return (x + m - 1) // m * m


def _block_kernel(x_ref, w_ref, b_ref, gamma_ref, beta_ref, mask_ref, *rest,
                  Cin_pad, H, W, WP, groups, cpg, has_scale_shift):
    # x_ref:    (1, Cin_pad, (H+2)*WP + 2) bf16 padded/flattened image
    # w_ref:    (Cout, 9*Cin_pad)          bf16 conv weights (tap-major cols)
    # b_ref/gamma_ref/beta_ref: (Cout, 1)  f32
    # mask_ref: (1, H*WP) f32 validity mask over the "wide" spatial grid
    # o_ref:    (1, Cout, H*WP) out dtype
    # xcol_ref: (9*Cin_pad, H*WP) bf16 VMEM scratch
    if has_scale_shift:
        scale_ref, shift_ref, o_ref, xcol_ref = rest
    else:
        scale_ref = shift_ref = None
        o_ref, xcol_ref = rest

    p_out = H * WP
    Cout = w_ref.shape[0]

    # ---- build the fused-K im2col block in bf16 VMEM scratch ----
    # 9 static shifted slices; tap row offsets t*Cin_pad are sublane-aligned
    # because Cin_pad is a multiple of 16 (bf16 pack).
    for dy in range(3):
        for dx in range(3):
            t = dy * 3 + dx
            s = dy * WP + dx
            xcol_ref[t * Cin_pad:(t + 1) * Cin_pad, :] = x_ref[0, :, s:s + p_out]

    # ---- 3x3 conv as one MXU matmul, K = 9*Cin_pad, bf16 in / f32 acc ----
    acc = jnp.dot(w_ref[...], xcol_ref[...],
                  preferred_element_type=jnp.float32)            # (Cout, P_out)
    acc = acc + b_ref[...]                                       # (Cout, 1) bcast

    # ---- GroupNorm: spatial reduce FIRST, then tiny group matmuls ----
    mask = mask_ref[...]                                         # (1, P_out)
    am = acc * mask
    ch_sum = jnp.sum(am, axis=1, keepdims=True)                  # (Cout, 1)
    ch_sq = jnp.sum(am * acc, axis=1, keepdims=True)             # (Cout, 1)

    # group membership generated in-kernel (iota compares, no int division)
    c0 = jax.lax.broadcasted_iota(jnp.int32, (Cout, groups), 0)
    g0 = jax.lax.broadcasted_iota(jnp.int32, (Cout, groups), 1) * cpg
    mem = jnp.logical_and(c0 >= g0, c0 < g0 + cpg).astype(jnp.float32)   # (Cout, G)
    c1 = jax.lax.broadcasted_iota(jnp.int32, (groups, Cout), 1)
    g1 = jax.lax.broadcasted_iota(jnp.int32, (groups, Cout), 0) * cpg
    memT = jnp.logical_and(c1 >= g1, c1 < g1 + cpg).astype(jnp.float32)  # (G, Cout)

    cnt = float(H * W * cpg)
    g_sum = jnp.dot(memT, ch_sum, preferred_element_type=jnp.float32)    # (G, 1)
    g_sq = jnp.dot(memT, ch_sq, preferred_element_type=jnp.float32)      # (G, 1)
    mean = jnp.dot(mem, g_sum, preferred_element_type=jnp.float32) / cnt  # (Cout,1)
    msq = jnp.dot(mem, g_sq, preferred_element_type=jnp.float32) / cnt    # (Cout,1)
    var = jnp.maximum(msq - mean * mean, 0.0)                    # clamp cancellation
    inv = jax.lax.rsqrt(var + EPS)

    xn = (acc - mean) * inv
    xn = xn * gamma_ref[...] + beta_ref[...]

    # ---- optional scale/shift (trace-time specialized) ----
    if has_scale_shift:
        xn = xn * (scale_ref[0] + 1.0) + shift_ref[0]

    # ---- SiLU ----
    out = xn * jax.nn.sigmoid(xn)
    o_ref[0] = out.astype(o_ref.dtype)


def block_forward(x_nchw, w_oihw, bias, gamma, beta, groups, scale_shift=None,
                  out_dtype=jnp.bfloat16):
    """Forward pass of `Block`. x_nchw: (N, Cin, H, W) -> (N, Cout, H, W)."""
    N, Cin, H, W = x_nchw.shape
    Cout = w_oihw.shape[0]
    assert Cout % groups == 0
    cpg = Cout // groups
    HP, WP = H + 2, W + 2
    Cin_pad = _round_up(Cin, 16)    # bf16 sublane pack -> aligned tap stores
    p_src = HP * WP + 2             # +2 so the (dy=2,dx=2) tap stays in bounds
    p_out = H * WP                  # "wide" grid; pad cols sliced off later

    # pad channels to Cin_pad and spatially by 1, flatten, cast bf16
    xp = jnp.pad(x_nchw, ((0, 0), (0, Cin_pad - Cin), (1, 1), (1, 1)))
    x_flat = jnp.pad(xp.reshape(N, Cin_pad, HP * WP),
                     ((0, 0), (0, 0), (0, 2))).astype(jnp.bfloat16)

    # conv weights (Cout, Cin, 3, 3) -> (Cout, 9*Cin_pad), col (dy*3+dx)*Cin_pad+i
    w9 = jnp.transpose(w_oihw, (0, 2, 3, 1))                    # (Cout, 3, 3, Cin)
    w9 = jnp.pad(w9, ((0, 0), (0, 0), (0, 0), (0, Cin_pad - Cin)))
    w_mat = w9.reshape(Cout, 9 * Cin_pad).astype(jnp.bfloat16)

    b2 = bias.reshape(Cout, 1).astype(jnp.float32)
    gamma2 = gamma.reshape(Cout, 1).astype(jnp.float32)
    beta2 = beta.reshape(Cout, 1).astype(jnp.float32)

    # validity mask over the wide spatial grid (drop the 2 pad columns per row)
    mask = ((jnp.arange(p_out) % WP) < W).astype(jnp.float32).reshape(1, p_out)

    has_ss = scale_shift is not None
    inputs = [x_flat, w_mat, b2, gamma2, beta2, mask]
    in_specs = [
        pl.BlockSpec((1, Cin_pad, p_src), lambda n: (n, 0, 0)),   # image
        pl.BlockSpec((Cout, 9 * Cin_pad), lambda n: (0, 0)),      # conv weights
        pl.BlockSpec((Cout, 1), lambda n: (0, 0)),                # conv bias
        pl.BlockSpec((Cout, 1), lambda n: (0, 0)),                # GN gamma
        pl.BlockSpec((Cout, 1), lambda n: (0, 0)),                # GN beta
        pl.BlockSpec((1, p_out), lambda n: (0, 0)),               # valid mask
    ]
    if has_ss:
        s, t = scale_shift
        inputs += [s.reshape(N, Cout, 1).astype(jnp.float32),
                   t.reshape(N, Cout, 1).astype(jnp.float32)]
        in_specs += [pl.BlockSpec((1, Cout, 1), lambda n: (n, 0, 0)),
                     pl.BlockSpec((1, Cout, 1), lambda n: (n, 0, 0))]

    kernel = functools.partial(_block_kernel, Cin_pad=Cin_pad, H=H, W=W, WP=WP,
                               groups=groups, cpg=cpg, has_scale_shift=has_ss)

    # scoped-VMEM budget from the actual buffers (double-buffered blocks +
    # scratch + f32 temporaries), with headroom; capped for v7x's 64 MiB.
    out_bytes = jnp.dtype(out_dtype).itemsize
    est = (2 * Cin_pad * p_src * 2                      # image block x2
           + 2 * Cout * 9 * Cin_pad * 2                 # weights x2
           + 2 * 3 * Cout * 4                           # bias/gamma/beta x2
           + 2 * p_out * 4                              # mask x2
           + (2 * 2 * Cout * 4 if has_ss else 0)        # scale/shift x2
           + 2 * Cout * p_out * out_bytes               # output block x2
           + 9 * Cin_pad * p_out * 2                    # bf16 im2col scratch
           + 4 * Cout * p_out * 4)                      # f32 temporaries
    vmem_limit = int(min(max(2 * est, 32 << 20), 48 << 20))

    out_wide = pl.pallas_call(
        kernel,
        out_shape=jax.ShapeDtypeStruct((N, Cout, p_out), out_dtype),
        grid_spec=pltpu.PrefetchScalarGridSpec(
            num_scalar_prefetch=0,
            grid=(N,),
            in_specs=in_specs,
            out_specs=pl.BlockSpec((1, Cout, p_out), lambda n: (n, 0, 0)),
            scratch_shapes=[pltpu.VMEM((9 * Cin_pad, p_out), jnp.bfloat16)],
        ),
        compiler_params=pltpu.CompilerParams(
            dimension_semantics=("parallel",),
            vmem_limit_bytes=vmem_limit),
    )(*inputs)

    # (N, Cout, H*WP) -> (N, Cout, H, W): drop the 2 pad columns per row.
    return out_wide.reshape(N, Cout, H, WP)[:, :, :, :W]


def _reference(x_nchw, w_oihw, bias, gamma, beta, groups, scale_shift):
    """Pure-JAX f32 reference reproducing the PyTorch forward."""
    y = jax.lax.conv_general_dilated(
        x_nchw, w_oihw, window_strides=(1, 1), padding="SAME",
        dimension_numbers=("NCHW", "OIHW", "NCHW"),
        precision=jax.lax.Precision.HIGHEST) + bias[None, :, None, None]
    N, C, H, W = y.shape
    yg = y.reshape(N, groups, C // groups, H, W)
    mean = yg.mean(axis=(2, 3, 4), keepdims=True)
    var = yg.var(axis=(2, 3, 4), keepdims=True)
    yn = (yg - mean) / jnp.sqrt(var + EPS)
    yn = yn.reshape(N, C, H, W) * gamma[None, :, None, None] + beta[None, :, None, None]
    if scale_shift is not None:
        s, t = scale_shift
        yn = yn * (s[:, :, None, None] + 1.0) + t[:, :, None, None]
    return yn * jax.nn.sigmoid(yn)


if __name__ == "__main__":
    N, Cin, H, W = 2, 4, 16, 16
    Cout, groups = 16, 8

    key = jax.random.PRNGKey(0)
    k1, k2, k3, k4, k5, k6, k7 = jax.random.split(key, 7)

    x = jax.random.normal(k1, (N, Cin, H, W), jnp.float32)
    w = 0.1 * jax.random.normal(k2, (Cout, Cin, 3, 3), jnp.float32)   # conv weight
    b = 0.1 * jax.random.normal(k3, (Cout,), jnp.float32)             # conv bias
    gamma = 1.0 + 0.1 * jax.random.normal(k4, (Cout,), jnp.float32)   # GN weight
    beta = 0.1 * jax.random.normal(k5, (Cout,), jnp.float32)          # GN bias
    scale = 0.1 * jax.random.normal(k6, (N, Cout), jnp.float32)
    shift = 0.1 * jax.random.normal(k7, (N, Cout), jnp.float32)

    # tolerance reflects bf16 MXU inputs (f32 accumulation) AND bf16 output
    # versus the f32 reference
    ATOL = RTOL = 2.5e-2

    # --- with scale_shift ---
    out = block_forward(x, w, b, gamma, beta, groups, (scale, shift))
    out = jax.block_until_ready(out)
    ref = _reference(x, w, b, gamma, beta, groups, (scale, shift))
    assert out.shape == (N, Cout, H, W)
    assert jnp.allclose(out.astype(jnp.float32), ref, atol=ATOL, rtol=RTOL), (
        float(jnp.max(jnp.abs(out.astype(jnp.float32) - ref))))

    # --- without scale_shift (trace-time specialized path) ---
    out2 = jax.block_until_ready(block_forward(x, w, b, gamma, beta, groups, None))
    ref2 = _reference(x, w, b, gamma, beta, groups, None)
    assert jnp.allclose(out2.astype(jnp.float32), ref2, atol=ATOL, rtol=RTOL), (
        float(jnp.max(jnp.abs(out2.astype(jnp.float32) - ref2))))

    print("KERNEL_OK")
</pallas_src>

<mosaic_0001>
module attributes {stable_mosaic.version = 11 : i64} {
  func.func @_block_kernel(%arg0: i32, %arg1: memref<1x16x326xbf16, #tpu.memory_space<vmem>>, %arg2: memref<16x144xbf16, #tpu.memory_space<vmem>>, %arg3: memref<16x1xf32, #tpu.memory_space<vmem>>, %arg4: memref<16x1xf32, #tpu.memory_space<vmem>>, %arg5: memref<16x1xf32, #tpu.memory_space<vmem>>, %arg6: memref<1x288xf32, #tpu.memory_space<vmem>>, %arg7: memref<1x16x1xf32, #tpu.memory_space<vmem>>, %arg8: memref<1x16x1xf32, #tpu.memory_space<vmem>>, %arg9: memref<1x16x288xbf16, #tpu.memory_space<vmem>>, %arg10: memref<144x288xbf16, #tpu.memory_space<vmem>>) attributes {dimension_semantics = [#tpu.dimension_semantics<parallel>], iteration_bounds = array<i64: 2>, scalar_prefetch = 0 : i64, scratch_operands = 1 : i64, tpu.core_type = #tpu.core_type<tc>, window_params = [{transform_indices = @transform_0, window_bounds = array<i64: 1, 16, 326>}, {pipeline_mode = #tpu.pipeline_mode<synchronous>, transform_indices = @transform_1, window_bounds = array<i64: 16, 144>}, {pipeline_mode = #tpu.pipeline_mode<synchronous>, transform_indices = @transform_2, window_bounds = array<i64: 16, 1>}, {pipeline_mode = #tpu.pipeline_mode<synchronous>, transform_indices = @transform_3, window_bounds = array<i64: 16, 1>}, {pipeline_mode = #tpu.pipeline_mode<synchronous>, transform_indices = @transform_4, window_bounds = array<i64: 16, 1>}, {pipeline_mode = #tpu.pipeline_mode<synchronous>, transform_indices = @transform_5, window_bounds = array<i64: 1, 288>}, {transform_indices = @transform_6, window_bounds = array<i64: 1, 16, 1>}, {transform_indices = @transform_7, window_bounds = array<i64: 1, 16, 1>}, {transform_indices = @transform_8, window_bounds = array<i64: 1, 16, 288>}]} {
    %c0 = arith.constant 0 : index
    %c0_0 = arith.constant 0 : index
    %c0_1 = arith.constant 0 : index
    %0 = vector.load %arg1[%c0, %c0_0, %c0_1] : memref<1x16x326xbf16, #tpu.memory_space<vmem>>, vector<1x16x288xbf16>
    %1 = vector.shape_cast %0 : vector<1x16x288xbf16> to vector<16x288xbf16>
    %c0_2 = arith.constant 0 : index
    %c0_3 = arith.constant 0 : index
    %2 = vector.load %arg10[%c0_2, %c0_3] : memref<144x288xbf16, #tpu.memory_space<vmem>>, vector<16x288xbf16>
    tpu.vector_store %arg10[%c0_2, %c0_3], %1 {strides = array<i32>} : memref<144x288xbf16, #tpu.memory_space<vmem>>, vector<16x288xbf16>,
    %c0_4 = arith.constant 0 : index
    %c0_5 = arith.constant 0 : index
    %c1 = arith.constant 1 : index
    %3 = vector.load %arg1[%c0_4, %c0_5, %c1] : memref<1x16x326xbf16, #tpu.memory_space<vmem>>, vector<1x16x288xbf16>
    %4 = vector.shape_cast %3 : vector<1x16x288xbf16> to vector<16x288xbf16>
    %c16 = arith.constant 16 : index
    %c0_6 = arith.constant 0 : index
    %5 = vector.load %arg10[%c16, %c0_6] : memref<144x288xbf16, #tpu.memory_space<vmem>>, vector<16x288xbf16>
    tpu.vector_store %arg10[%c16, %c0_6], %4 {strides = array<i32>} : memref<144x288xbf16, #tpu.memory_space<vmem>>, vector<16x288xbf16>,
    %c0_7 = arith.constant 0 : index
    %c0_8 = arith.constant 0 : index
    %c2 = arith.constant 2 : index
    %6 = vector.load %arg1[%c0_7, %c0_8, %c2] : memref<1x16x326xbf16, #tpu.memory_space<vmem>>, vector<1x16x288xbf16>
    %7 = vector.shape_cast %6 : vector<1x16x288xbf16> to vector<16x288xbf16>
    %c32 = arith.constant 32 : index
    %c0_9 = arith.constant 0 : index
    %8 = vector.load %arg10[%c32, %c0_9] : memref<144x288xbf16, #tpu.memory_space<vmem>>, vector<16x288xbf16>
    tpu.vector_store %arg10[%c32, %c0_9], %7 {strides = array<i32>} : memref<144x288xbf16, #tpu.memory_space<vmem>>, vector<16x288xbf16>,
    %c0_10 = arith.constant 0 : index
    %c0_11 = arith.constant 0 : index
    %c18 = arith.constant 18 : index
    %9 = vector.load %arg1[%c0_10, %c0_11, %c18] : memref<1x16x326xbf16, #tpu.memory_space<vmem>>, vector<1x16x288xbf16>
    %10 = vector.shape_cast %9 : vector<1x16x288xbf16> to vector<16x288xbf16>
    %c48 = arith.constant 48 : index
    %c0_12 = arith.constant 0 : index
    %11 = vector.load %arg10[%c48, %c0_12] : memref<144x288xbf16, #tpu.memory_space<vmem>>, vector<16x288xbf16>
    tpu.vector_store %arg10[%c48, %c0_12], %10 {strides = array<i32>} : memref<144x288xbf16, #tpu.memory_space<vmem>>, vector<16x288xbf16>,
    %c0_13 = arith.constant 0 : index
    %c0_14 = arith.constant 0 : index
    %c19 = arith.constant 19 : index
    %12 = vector.load %arg1[%c0_13, %c0_14, %c19] : memref<1x16x326xbf16, #tpu.memory_space<vmem>>, vector<1x16x288xbf16>
    %13 = vector.shape_cast %12 : vector<1x16x288xbf16> to vector<16x288xbf16>
    %c64 = arith.constant 64 : index
    %c0_15 = arith.constant 0 : index
    %14 = vector.load %arg10[%c64, %c0_15] : memref<144x288xbf16, #tpu.memory_space<vmem>>, vector<16x288xbf16>
    tpu.vector_store %arg10[%c64, %c0_15], %13 {strides = array<i32>} : memref<144x288xbf16, #tpu.memory_space<vmem>>, vector<16x288xbf16>,
    %c0_16 = arith.constant 0 : index
    %c0_17 = arith.constant 0 : index
    %c20 = arith.constant 20 : index
    %15 = vector.load %arg1[%c0_16, %c0_17, %c20] : memref<1x16x326xbf16, #tpu.memory_space<vmem>>, vector<1x16x288xbf16>
    %16 = vector.shape_cast %15 : vector<1x16x288xbf16> to vector<16x288xbf16>
    %c80 = arith.constant 80 : index
    %c0_18 = arith.constant 0 : index
    %17 = vector.load %arg10[%c80, %c0_18] : memref<144x288xbf16, #tpu.memory_space<vmem>>, vector<16x288xbf16>
    tpu.vector_store %arg10[%c80, %c0_18], %16 {strides = array<i32>} : memref<144x288xbf16, #tpu.memory_space<vmem>>, vector<16x288xbf16>,
    %c0_19 = arith.constant 0 : index
    %c0_20 = arith.constant 0 : index
    %c36 = arith.constant 36 : index
    %18 = vector.load %arg1[%c0_19, %c0_20, %c36] : memref<1x16x326xbf16, #tpu.memory_space<vmem>>, vector<1x16x288xbf16>
    %19 = vector.shape_cast %18 : vector<1x16x288xbf16> to vector<16x288xbf16>
    %c96 = arith.constant 96 : index
    %c0_21 = arith.constant 0 : index
    %20 = vector.load %arg10[%c96, %c0_21] : memref<144x288xbf16, #tpu.memory_space<vmem>>, vector<16x288xbf16>
    tpu.vector_store %arg10[%c96, %c0_21], %19 {strides = array<i32>} : memref<144x288xbf16, #tpu.memory_space<vmem>>, vector<16x288xbf16>,
    %c0_22 = arith.constant 0 : index
    %c0_23 = arith.constant 0 : index
    %c37 = arith.constant 37 : index
    %21 = vector.load %arg1[%c0_22, %c0_23, %c37] : memref<1x16x326xbf16, #tpu.memory_space<vmem>>, vector<1x16x288xbf16>
    %22 = vector.shape_cast %21 : vector<1x16x288xbf16> to vector<16x288xbf16>
    %c112 = arith.constant 112 : index
    %c0_24 = arith.constant 0 : index
    %23 = vector.load %arg10[%c112, %c0_24] : memref<144x288xbf16, #tpu.memory_space<vmem>>, vector<16x288xbf16>
    tpu.vector_store %arg10[%c112, %c0_24], %22 {strides = array<i32>} : memref<144x288xbf16, #tpu.memory_space<vmem>>, vector<16x288xbf16>,
    %c0_25 = arith.constant 0 : index
    %c0_26 = arith.constant 0 : index
    %c38 = arith.constant 38 : index
    %24 = vector.load %arg1[%c0_25, %c0_26, %c38] : memref<1x16x326xbf16, #tpu.memory_space<vmem>>, vector<1x16x288xbf16>
    %25 = vector.shape_cast %24 : vector<1x16x288xbf16> to vector<16x288xbf16>
    %c128 = arith.constant 128 : index
    %c0_27 = arith.constant 0 : index
    %26 = vector.load %arg10[%c128, %c0_27] : memref<144x288xbf16, #tpu.memory_space<vmem>>, vector<16x288xbf16>
    tpu.vector_store %arg10[%c128, %c0_27], %25 {strides = array<i32>} : memref<144x288xbf16, #tpu.memory_space<vmem>>, vector<16x288xbf16>,
    %c0_28 = arith.constant 0 : index
    %c0_29 = arith.constant 0 : index
    %27 = vector.load %arg2[%c0_28, %c0_29] : memref<16x144xbf16, #tpu.memory_space<vmem>>, vector<16x144xbf16>
    %c0_30 = arith.constant 0 : index
    %c0_31 = arith.constant 0 : index
    %28 = vector.load %arg10[%c0_30, %c0_31] : memref<144x288xbf16, #tpu.memory_space<vmem>>, vector<144x288xbf16>
    %cst = arith.constant dense<0.000000e+00> : vector<16x288xf32>
    %29 = tpu.matmul %27, %28, %cst {dimension_numbers = #tpu.dot_dimension_numbers<[1], [0], [0], [1], [0, 0, 1, 1], [], []>} : vector<16x144xbf16>, vector<144x288xbf16>, vector<16x288xf32> -> vector<16x288xf32>
    %c0_32 = arith.constant 0 : index
    %c0_33 = arith.constant 0 : index
    %30 = vector.load %arg3[%c0_32, %c0_33] : memref<16x1xf32, #tpu.memory_space<vmem>>, vector<16x1xf32>
    %31 = vector.broadcast %30 : vector<16x1xf32> to vector<16x288xf32>
    %32 = arith.addf %29, %31 : vector<16x288xf32>
    %c0_34 = arith.constant 0 : index
    %c0_35 = arith.constant 0 : index
    %33 = vector.load %arg6[%c0_34, %c0_35] : memref<1x288xf32, #tpu.memory_space<vmem>>, vector<1x288xf32>
    %34 = vector.broadcast %33 : vector<1x288xf32> to vector<16x288xf32>
    %35 = arith.mulf %32, %34 : vector<16x288xf32>
    %cst_36 = arith.constant dense<0.000000e+00> : vector<16xf32>
    %36 = vector.multi_reduction <add>, %35, %cst_36 [1] : vector<16x288xf32> to vector<16xf32>
    %37 = vector.shape_cast %36 : vector<16xf32> to vector<16x1xf32>
    %38 = arith.mulf %35, %32 : vector<16x288xf32>
    %cst_37 = arith.constant dense<0.000000e+00> : vector<16xf32>
    %39 = vector.multi_reduction <add>, %38, %cst_37 [1] : vector<16x288xf32> to vector<16xf32>
    %40 = vector.shape_cast %39 : vector<16xf32> to vector<16x1xf32>
    %41 = tpu.iota {dimensions = array<i32: 0>} : vector<16x8xi32>
    %42 = tpu.iota {dimensions = array<i32: 1>} : vector<16x8xi32>
    %c2_i32 = arith.constant 2 : i32
    %43 = vector.broadcast %c2_i32 : i32 to vector<16x8xi32>
    %44 = arith.muli %42, %43 : vector<16x8xi32>
    %45 = arith.cmpi sge, %41, %44 : vector<16x8xi32>
    %c2_i32_38 = arith.constant 2 : i32
    %46 = vector.broadcast %c2_i32_38 : i32 to vector<16x8xi32>
    %47 = arith.addi %44, %46 : vector<16x8xi32>
    %48 = arith.cmpi slt, %41, %47 : vector<16x8xi32>
    %49 = arith.andi %45, %48 : vector<16x8xi1>
    %50 = arith.extui %49 : vector<16x8xi1> to vector<16x8xi32>
    %51 = arith.sitofp %50 : vector<16x8xi32> to vector<16x8xf32>
    %52 = tpu.iota {dimensions = array<i32: 1>} : vector<8x16xi32>
    %53 = tpu.iota {dimensions = array<i32: 0>} : vector<8x16xi32>
    %c2_i32_39 = arith.constant 2 : i32
    %54 = vector.broadcast %c2_i32_39 : i32 to vector<8x16xi32>
    %55 = arith.muli %53, %54 : vector<8x16xi32>
    %56 = arith.cmpi sge, %52, %55 : vector<8x16xi32>
    %c2_i32_40 = arith.constant 2 : i32
    %57 = vector.broadcast %c2_i32_40 : i32 to vector<8x16xi32>
    %58 = arith.addi %55, %57 : vector<8x16xi32>
    %59 = arith.cmpi slt, %52, %58 : vector<8x16xi32>
    %60 = arith.andi %56, %59 : vector<8x16xi1>
    %61 = arith.extui %60 : vector<8x16xi1> to vector<8x16xi32>
    %62 = arith.sitofp %61 : vector<8x16xi32> to vector<8x16xf32>
    %cst_41 = arith.constant dense<0.000000e+00> : vector<8x1xf32>
    %63 = tpu.matmul %62, %37, %cst_41 {dimension_numbers = #tpu.dot_dimension_numbers<[1], [0], [0], [1], [0, 0, 1, 1], [], []>} : vector<8x16xf32>, vector<16x1xf32>, vector<8x1xf32> -> vector<8x1xf32>
    %cst_42 = arith.constant dense<0.000000e+00> : vector<8x1xf32>
    %64 = tpu.matmul %62, %40, %cst_42 {dimension_numbers = #tpu.dot_dimension_numbers<[1], [0], [0], [1], [0, 0, 1, 1], [], []>} : vector<8x16xf32>, vector<16x1xf32>, vector<8x1xf32> -> vector<8x1xf32>
    %cst_43 = arith.constant dense<0.000000e+00> : vector<16x1xf32>
    %65 = tpu.matmul %51, %63, %cst_43 {dimension_numbers = #tpu.dot_dimension_numbers<[1], [0], [0], [1], [0, 0, 1, 1], [], []>} : vector<16x8xf32>, vector<8x1xf32>, vector<16x1xf32> -> vector<16x1xf32>
    %cst_44 = arith.constant 5.120000e+02 : f32
    %66 = vector.broadcast %cst_44 : f32 to vector<16x1xf32>
    %67 = arith.divf %65, %66 : vector<16x1xf32>
    %cst_45 = arith.constant dense<0.000000e+00> : vector<16x1xf32>
    %68 = tpu.matmul %51, %64, %cst_45 {dimension_numbers = #tpu.dot_dimension_numbers<[1], [0], [0], [1], [0, 0, 1, 1], [], []>} : vector<16x8xf32>, vector<8x1xf32>, vector<16x1xf32> -> vector<16x1xf32>
    %cst_46 = arith.constant 5.120000e+02 : f32
    %69 = vector.broadcast %cst_46 : f32 to vector<16x1xf32>
    %70 = arith.divf %68, %69 : vector<16x1xf32>
    %71 = arith.mulf %67, %67 : vector<16x1xf32>
    %72 = arith.subf %70, %71 : vector<16x1xf32>
    %cst_47 = arith.constant 0.000000e+00 : f32
    %73 = vector.broadcast %cst_47 : f32 to vector<16x1xf32>
    %74 = arith.maximumf %72, %73 : vector<16x1xf32>
    %cst_48 = arith.constant 9.99999974E-6 : f32
    %75 = vector.broadcast %cst_48 : f32 to vector<16x1xf32>
    %76 = arith.addf %74, %75 : vector<16x1xf32>
    %77 = math.rsqrt %76 : vector<16x1xf32>
    %78 = vector.broadcast %67 : vector<16x1xf32> to vector<16x288xf32>
    %79 = arith.subf %32, %78 : vector<16x288xf32>
    %80 = vector.broadcast %77 : vector<16x1xf32> to vector<16x288xf32>
    %81 = arith.mulf %79, %80 : vector<16x288xf32>
    %c0_49 = arith.constant 0 : index
    %c0_50 = arith.constant 0 : index
    %82 = vector.load %arg4[%c0_49, %c0_50] : memref<16x1xf32, #tpu.memory_space<vmem>>, vector<16x1xf32>
    %83 = vector.broadcast %82 : vector<16x1xf32> to vector<16x288xf32>
    %84 = arith.mulf %81, %83 : vector<16x288xf32>
    %c0_51 = arith.constant 0 : index
    %c0_52 = arith.constant 0 : index
    %85 = vector.load %arg5[%c0_51, %c0_52] : memref<16x1xf32, #tpu.memory_space<vmem>>, vector<16x1xf32>
    %86 = vector.broadcast %85 : vector<16x1xf32> to vector<16x288xf32>
    %87 = arith.addf %84, %86 : vector<16x288xf32>
    %c0_53 = arith.constant 0 : index
    %c0_54 = arith.constant 0 : index
    %c0_55 = arith.constant 0 : index
    %88 = vector.load %arg7[%c0_53, %c0_54, %c0_55] : memref<1x16x1xf32, #tpu.memory_space<vmem>>, vector<1x16x1xf32>
    %89 = vector.shape_cast %88 : vector<1x16x1xf32> to vector<16x1xf32>
    %cst_56 = arith.constant 1.000000e+00 : f32
    %90 = vector.broadcast %cst_56 : f32 to vector<16x1xf32>
    %91 = arith.addf %89, %90 : vector<16x1xf32>
    %92 = vector.broadcast %91 : vector<16x1xf32> to vector<16x288xf32>
    %93 = arith.mulf %87, %92 : vector<16x288xf32>
    %c0_57 = arith.constant 0 : index
    %c0_58 = arith.constant 0 : index
    %c0_59 = arith.constant 0 : index
    %94 = vector.load %arg8[%c0_57, %c0_58, %c0_59] : memref<1x16x1xf32, #tpu.memory_space<vmem>>, vector<1x16x1xf32>
    %95 = vector.shape_cast %94 : vector<1x16x1xf32> to vector<16x1xf32>
    %96 = vector.broadcast %95 : vector<16x1xf32> to vector<16x288xf32>
    %97 = arith.addf %93, %96 : vector<16x288xf32>
    %98 = arith.negf %97 : vector<16x288xf32>
    %99 = math.exp %98 : vector<16x288xf32>
    %cst_60 = arith.constant 1.000000e+00 : f32
    %100 = vector.broadcast %cst_60 : f32 to vector<16x288xf32>
    %101 = arith.addf %100, %99 : vector<16x288xf32>
    %102 = arith.divf %100, %101 : vector<16x288xf32>
    %103 = arith.mulf %97, %102 : vector<16x288xf32>
    %104 = arith.truncf %103 : vector<16x288xf32> to vector<16x288xbf16>
    %c0_61 = arith.constant 0 : index
    %c0_62 = arith.constant 0 : index
    %c0_63 = arith.constant 0 : index
    %105 = vector.load %arg9[%c0_61, %c0_62, %c0_63] : memref<1x16x288xbf16, #tpu.memory_space<vmem>>, vector<1x16x288xbf16>
    %106 = vector.shape_cast %105 : vector<1x16x288xbf16> to vector<16x288xbf16>
    %107 = vector.shape_cast %104 : vector<16x288xbf16> to vector<1x16x288xbf16>
    tpu.vector_store %arg9[%c0_61, %c0_62, %c0_63], %107 {strides = array<i32>} : memref<1x16x288xbf16, #tpu.memory_space<vmem>>, vector<1x16x288xbf16>,
    return
  }
  func.func @transform_0(%arg0: i32) -> (i32, i32, i32) {
    %c0_i32 = arith.constant 0 : i32
    %c0_i32_0 = arith.constant 0 : i32
    %c0_i32_1 = arith.constant 0 : i32
    return %arg0, %c0_i32, %c0_i32_0 : i32, i32, i32
  }
  func.func @transform_1(%arg0: i32) -> (i32, i32) {
    %c0_i32 = arith.constant 0 : i32
    %c0_i32_0 = arith.constant 0 : i32
    %c0_i32_1 = arith.constant 0 : i32
    return %c0_i32, %c0_i32_0 : i32, i32
  }
  func.func @transform_2(%arg0: i32) -> (i32, i32) {
    %c0_i32 = arith.constant 0 : i32
    %c0_i32_0 = arith.constant 0 : i32
    %c0_i32_1 = arith.constant 0 : i32
    return %c0_i32, %c0_i32_0 : i32, i32
  }
  func.func @transform_3(%arg0: i32) -> (i32, i32) {
    %c0_i32 = arith.constant 0 : i32
    %c0_i32_0 = arith.constant 0 : i32
    %c0_i32_1 = arith.constant 0 : i32
    return %c0_i32, %c0_i32_0 : i32, i32
  }
  func.func @transform_4(%arg0: i32) -> (i32, i32) {
    %c0_i32 = arith.constant 0 : i32
    %c0_i32_0 = arith.constant 0 : i32
    %c0_i32_1 = arith.constant 0 : i32
    return %c0_i32, %c0_i32_0 : i32, i32
  }
  func.func @transform_5(%arg0: i32) -> (i32, i32) {
    %c0_i32 = arith.constant 0 : i32
    %c0_i32_0 = arith.constant 0 : i32
    %c0_i32_1 = arith.constant 0 : i32
    return %c0_i32, %c0_i32_0 : i32, i32
  }
  func.func @transform_6(%arg0: i32) -> (i32, i32, i32) {
    %c0_i32 = arith.constant 0 : i32
    %c0_i32_0 = arith.constant 0 : i32
    %c0_i32_1 = arith.constant 0 : i32
    return %arg0, %c0_i32, %c0_i32_0 : i32, i32, i32
  }
  func.func @transform_7(%arg0: i32) -> (i32, i32, i32) {
    %c0_i32 = arith.constant 0 : i32
    %c0_i32_0 = arith.constant 0 : i32
    %c0_i32_1 = arith.constant 0 : i32
    return %arg0, %c0_i32, %c0_i32_0 : i32, i32, i32
  }
  func.func @transform_8(%arg0: i32) -> (i32, i32, i32) {
    %c0_i32 = arith.constant 0 : i32
    %c0_i32_0 = arith.constant 0 : i32
    %c0_i32_1 = arith.constant 0 : i32
    return %arg0, %c0_i32, %c0_i32_0 : i32, i32, i32
  }
}

</mosaic_0001>

<llo_original>
// kernel: tpu_custom_call.1
$region0: #{tpu_custom_call.1}
  #allocation0 [shape = 'u32[]', space=smem, size = 0x4, offset = 0x4, fixed_abs, tag = 'smem constant byte address 0x4 - core index']
  #allocation1 [shape = 'u32[144,128]{1,0:T(1,128)}', space=vmem, size = 0x12000, scoped, tag = 'internal scratch']
  #allocation2 [shape = 'bf16[144,288]{1,0:T(8,128)(2,1)}', space=vmem, size = 0x1b000, scoped, tag = 'scratch operand']
  %s0 = inlined_call_operand.vmem [shape: bf16[2,16,326], index: 0, kind: input, shape index: {}]
  %s1 = inlined_call_operand.vmem [shape: bf16[16,144], index: 1, kind: input, shape index: {}]
  %s2 = inlined_call_operand.vmem [shape: f32[16,1], index: 2, kind: input, shape index: {}]
  %s3 = inlined_call_operand.vmem [shape: f32[16,1], index: 3, kind: input, shape index: {}]
  %s4 = inlined_call_operand.vmem [shape: f32[16,1], index: 4, kind: input, shape index: {}]
  %s5 = inlined_call_operand.vmem [shape: f32[1,288], index: 5, kind: input, shape index: {}]
  %s6 = inlined_call_operand.vmem [shape: f32[2,16,1], index: 6, kind: input, shape index: {}]
  %s7 = inlined_call_operand.vmem [shape: f32[2,16,1], index: 7, kind: input, shape index: {}]
  %s8 = inlined_call_operand.hbm [shape: bf16[2,16,288], index: 8, kind: output, shape index: {}]
  %s9 = sld [smem:[#allocation0]]
  $region65: #{tpu_custom_call.1} parent=0
    _
  %s11 = ssub.s32 1, %s9
  %s12 = scalar_select 0, %s11, %s9
  $region1: #{tpu_custom_call.1} parent=0
    #allocation3 [shape = 'u8[24576]{0}', space=vmem, size = 0x6000, scoped, tag = 'output window, operand 0']
    #allocation4 [shape = 's32[2]{0}', space=sflag, size = 0x8, scoped, tag = 'scoped memory for tpu_custom_call.1']
    %13 = vsyncpa [#allocation4], 0
    %s14 = scalar_lea.sflag [#allocation4], 1
    %15 = vsyncpa %s14, 0
    loop: start=0, step=1, limit=4
    $region2: #{tpu_custom_call.1} parent=1 // loop_pre_header
      _
    $region3: #{tpu_custom_call.1} parent=1 // loop_header
      %s17 = sphi 0, %s21
      %p18 = scmp.ge.s32.totalorder %s17, 4
      %s27 = sphi 0, %s29
      %s30 = sphi 0, %s27
      %s31 = sphi 0, %s30
      %s47 = sphi 0, %s31
      %s51 = sphi 0, %s51
      %s53 = sphi 0, %s51
      %s54 = sphi 0, %s53
      %s68 = sphi 0, %s54
      %s72 = sphi 0, %s72
      %s74 = sphi 0, %s72
      %s75 = sphi 0, %s74
      %s89 = sphi 0, %s75
      %s93 = sphi 0, %s93
      %s95 = sphi 0, %s93
      %s96 = sphi 0, %s95
      %s110 = sphi 0, %s96
      %s114 = sphi 0, %s114
      %s116 = sphi 0, %s114
      %s117 = sphi 0, %s116
      %s131 = sphi 0, %s117
      %s135 = sphi 0, %s135
      %s137 = sphi 0, %s135
      %s138 = sphi 0, %s137
      %s152 = sphi 0, %s138
      %s158 = sphi 0, %s160
      %s161 = sphi 0, %s158
      %s162 = sphi 0, %s161
      %s178 = sphi 0, %s162
      %s184 = sphi 0, %s186
      %s187 = sphi 0, %s184
      %s188 = sphi 0, %s187
      %s204 = sphi 0, %s188
      %s210 = sphi 0, %s212
      %s213 = sphi 0, %s210
      %s214 = sphi 0, %s213
      %s230 = sphi 0, %s214
    $region4: #{tpu_custom_call.1} parent=1 // loop_header_branch
      %20 = sbr.rel (%p18) target = $region8
    $region5: #{tpu_custom_call.1} parent=1 // loop_body
      %s22 = ssub.s32 %s17, 1
      %s23 = ssub.s32 %s17, 2
      %s24 = sadd.s32 %s17, 1
      %s25 = ssub.s32 %s17, %s24
      %p26 = scmp.eq.s32.totalorder %s25, 0
      %s28 = sadd.s32 %s27, 1
      %s29 = scalar_select %p26, %s27, %s28
      %p32 = pneg %p26
      %p33 = scmp.eq.s32.totalorder %s17, 1
      %p34 = por %p32, %p33
      %p35 = scmp.ne.s32.totalorder %s27, %s30
      %p36 = scmp.eq.s32.totalorder %s17, 0
      %p37 = por %p35, %p36
      %p38 = scmp.ne.s32.totalorder %s27, %s30
      %p39 = scmp.eq.s32.totalorder %s22, 1
      %p40 = por %p38, %p39
      %p41 = scmp.ne.s32.totalorder %s30, %s31
      %p42 = scmp.eq.s32.totalorder %s22, 0
      %p43 = por %p41, %p42
      %p44 = scmp.ne.s32.totalorder %s30, %s31
      %p45 = scmp.eq.s32.totalorder %s23, 1
      %p46 = por %p44, %p45
      %p48 = scmp.ne.s32.totalorder %s31, %s47
      %p49 = scmp.eq.s32.totalorder %s23, 0
      %p50 = por %p48, %p49
      %s52 = sadd.s32 %s51, 1
      %p55 = scmp.eq.s32.totalorder %s17, 1
      %p56 = scmp.ne.s32.totalorder %s51, %s53
      %p57 = scmp.eq.s32.totalorder %s17, 0
      %p58 = por %p56, %p57
      %p59 = scmp.ne.s32.totalorder %s51, %s53
      %p60 = scmp.eq.s32.totalorder %s22, 1
      %p61 = por %p59, %p60
      %p62 = scmp.ne.s32.totalorder %s53, %s54
      %p63 = scmp.eq.s32.totalorder %s22, 0
      %p64 = por %p62, %p63
      %p65 = scmp.ne.s32.totalorder %s53, %s54
      %p66 = scmp.eq.s32.totalorder %s23, 1
      %p67 = por %p65, %p66
      %p69 = scmp.ne.s32.totalorder %s54, %s68
      %p70 = scmp.eq.s32.totalorder %s23, 0
      %p71 = por %p69, %p70
      %s73 = sadd.s32 %s72, 1
      %p76 = scmp.eq.s32.totalorder %s17, 1
      %p77 = scmp.ne.s32.totalorder %s72, %s74
      %p78 = scmp.eq.s32.totalorder %s17, 0
      %p79 = por %p77, %p78
      %p80 = scmp.ne.s32.totalorder %s72, %s74
      %p81 = scmp.eq.s32.totalorder %s22, 1
      %p82 = por %p80, %p81
      %p83 = scmp.ne.s32.totalorder %s74, %s75
      %p84 = scmp.eq.s32.totalorder %s22, 0
      %p85 = por %p83, %p84
      %p86 = scmp.ne.s32.totalorder %s74, %s75
      %p87 = scmp.eq.s32.totalorder %s23, 1
      %p88 = por %p86, %p87
      %p90 = scmp.ne.s32.totalorder %s75, %s89
      %p91 = scmp.eq.s32.totalorder %s23, 0
      %p92 = por %p90, %p91
      %s94 = sadd.s32 %s93, 1
      %p97 = scmp.eq.s32.totalorder %s17, 1
      %p98 = scmp.ne.s32.totalorder %s93, %s95
      %p99 = scmp.eq.s32.totalorder %s17, 0
      %p100 = por %p98, %p99
      %p101 = scmp.ne.s32.totalorder %s93, %s95
      %p102 = scmp.eq.s32.totalorder %s22, 1
      %p103 = por %p101, %p102
      %p104 = scmp.ne.s32.totalorder %s95, %s96
      %p105 = scmp.eq.s32.totalorder %s22, 0
      %p106 = por %p104, %p105
      %p107 = scmp.ne.s32.totalorder %s95, %s96
      %p108 = scmp.eq.s32.totalorder %s23, 1
      %p109 = por %p107, %p108
      %p111 = scmp.ne.s32.totalorder %s96, %s110
      %p112 = scmp.eq.s32.totalorder %s23, 0
      %p113 = por %p111, %p112
      %s115 = sadd.s32 %s114, 1
      %p118 = scmp.eq.s32.totalorder %s17, 1
      %p119 = scmp.ne.s32.totalorder %s114, %s116
      %p120 = scmp.eq.s32.totalorder %s17, 0
      %p121 = por %p119, %p120
      %p122 = scmp.ne.s32.totalorder %s114, %s116
      %p123 = scmp.eq.s32.totalorder %s22, 1
      %p124 = por %p122, %p123
      %p125 = scmp.ne.s32.totalorder %s116, %s117
      %p126 = scmp.eq.s32.totalorder %s22, 0
      %p127 = por %p125, %p126
      %p128 = scmp.ne.s32.totalorder %s116, %s117
      %p129 = scmp.eq.s32.totalorder %s23, 1
      %p130 = por %p128, %p129
      %p132 = scmp.ne.s32.totalorder %s117, %s131
      %p133 = scmp.eq.s32.totalorder %s23, 0
      %p134 = por %p132, %p133
      %s136 = sadd.s32 %s135, 1
      %p139 = scmp.eq.s32.totalorder %s17, 1
      %p140 = scmp.ne.s32.totalorder %s135, %s137
      %p141 = scmp.eq.s32.totalorder %s17, 0
      %p142 = por %p140, %p141
      %p143 = scmp.ne.s32.totalorder %s135, %s137
      %p144 = scmp.eq.s32.totalorder %s22, 1
      %p145 = por %p143, %p144
      %p146 = scmp.ne.s32.totalorder %s137, %s138
      %p147 = scmp.eq.s32.totalorder %s22, 0
      %p148 = por %p146, %p147
      %p149 = scmp.ne.s32.totalorder %s137, %s138
      %p150 = scmp.eq.s32.totalorder %s23, 1
      %p151 = por %p149, %p150
      %p153 = scmp.ne.s32.totalorder %s138, %s152
      %p154 = scmp.eq.s32.totalorder %s23, 0
      %p155 = por %p153, %p154
      %s156 = ssub.s32 %s17, %s24
      %p157 = scmp.eq.s32.totalorder %s156, 0
      %s159 = sadd.s32 %s158, 1
      %s160 = scalar_select %p157, %s158, %s159
      %p163 = pneg %p157
      %p164 = scmp.eq.s32.totalorder %s17, 1
      %p165 = por %p163, %p164
      %p166 = scmp.ne.s32.totalorder %s158, %s161
      %p167 = scmp.eq.s32.totalorder %s17, 0
      %p168 = por %p166, %p167
      %p169 = scmp.ne.s32.totalorder %s158, %s161
      %p170 = scmp.eq.s32.totalorder %s22, 1
      %p171 = por %p169, %p170
      %p172 = scmp.ne.s32.totalorder %s161, %s162
      %p173 = scmp.eq.s32.totalorder %s22, 0
      %p174 = por %p172, %p173
      %p175 = scmp.ne.s32.totalorder %s161, %s162
      %p176 = scmp.eq.s32.totalorder %s23, 1
      %p177 = por %p175, %p176
      %p179 = scmp.ne.s32.totalorder %s162, %s178
      %p180 = scmp.eq.s32.totalorder %s23, 0
      %p181 = por %p179, %p180
      %s182 = ssub.s32 %s17, %s24
      %p183 = scmp.eq.s32.totalorder %s182, 0
      %s185 = sadd.s32 %s184, 1
      %s186 = scalar_select %p183, %s184, %s185
      %p189 = pneg %p183
      %p190 = scmp.eq.s32.totalorder %s17, 1
      %p191 = por %p189, %p190
      %p192 = scmp.ne.s32.totalorder %s184, %s187
      %p193 = scmp.eq.s32.totalorder %s17, 0
      %p194 = por %p192, %p193
      %p195 = scmp.ne.s32.totalorder %s184, %s187
      %p196 = scmp.eq.s32.totalorder %s22, 1
      %p197 = por %p195, %p196
      %p198 = scmp.ne.s32.totalorder %s187, %s188
      %p199 = scmp.eq.s32.totalorder %s22, 0
      %p200 = por %p198, %p199
      %p201 = scmp.ne.s32.totalorder %s187, %s188
      %p202 = scmp.eq.s32.totalorder %s23, 1
      %p203 = por %p201, %p202
      %p205 = scmp.ne.s32.totalorder %s188, %s204
      %p206 = scmp.eq.s32.totalorder %s23, 0
      %p207 = por %p205, %p206
      %s208 = ssub.s32 %s17, %s24
      %p209 = scmp.eq.s32.totalorder %s208, 0
      %s211 = sadd.s32 %s210, 1
      %s212 = scalar_select %p209, %s210, %s211
      %p215 = pneg %p209
      %p216 = scmp.eq.s32.totalorder %s17, 1
      %p217 = por %p215, %p216
      %p218 = scmp.ne.s32.totalorder %s210, %s213
      %p219 = scmp.eq.s32.totalorder %s17, 0
      %p220 = por %p218, %p219
      %p221 = scmp.ne.s32.totalorder %s210, %s213
      %p222 = scmp.eq.s32.totalorder %s22, 1
      %p223 = por %p221, %p222
      %p224 = scmp.ne.s32.totalorder %s213, %s214
      %p225 = scmp.eq.s32.totalorder %s22, 0
      %p226 = por %p224, %p225
      %p227 = scmp.ne.s32.totalorder %s213, %s214
      %p228 = scmp.eq.s32.totalorder %s23, 1
      %p229 = por %p227, %p228
      %p231 = scmp.ne.s32.totalorder %s214, %s230
      %p232 = scmp.eq.s32.totalorder %s23, 0
      %p233 = por %p231, %p232
      %p234 = scmp.le.s32.totalorder 1, %s17
      %p235 = scmp.lt.s32.totalorder %s17, 3
      %p236 = pnand %p234, %p235
      %p237 = pneg %p236
      // Predicated region
      $region9: #{tpu_custom_call.1} parent=5 // pred_check
        _
      $region10: #{tpu_custom_call.1} parent=5 // pred_check_branch
        %239 = sbr.rel (%p236) target = $region12
      $region11: #{tpu_custom_call.1} parent=5 // pred_region
        %s240 = ssub.s32 %s17, 1
        // Predicated region
        $region13: #{tpu_custom_call.1} parent=11 // pred_check
          %p241 = pneg %p64
        $region14: #{tpu_custom_call.1} parent=11 // pred_check_branch
          %243 = sbr.rel (%p241) target = $region16
        $region15: #{tpu_custom_call.1} parent=11 // pred_region
          _
        $region16: #{tpu_custom_call.1} parent=11 // pred_fallthru
          _
        // Predicated region
        $region17: #{tpu_custom_call.1} parent=11 // pred_check
          %p244 = pneg %p85
        $region18: #{tpu_custom_call.1} parent=11 // pred_check_branch
          %246 = sbr.rel (%p244) target = $region20
        $region19: #{tpu_custom_call.1} parent=11 // pred_region
          _
        $region20: #{tpu_custom_call.1} parent=11 // pred_fallthru
          _
        // Predicated region
        $region21: #{tpu_custom_call.1} parent=11 // pred_check
          %p247 = pneg %p106
        $region22: #{tpu_custom_call.1} parent=11 // pred_check_branch
          %249 = sbr.rel (%p247) target = $region24
        $region23: #{tpu_custom_call.1} parent=11 // pred_region
          _
        $region24: #{tpu_custom_call.1} parent=11 // pred_fallthru
          _
        // Predicated region
        $region25: #{tpu_custom_call.1} parent=11 // pred_check
          %p250 = pneg %p127
        $region26: #{tpu_custom_call.1} parent=11 // pred_check_branch
          %252 = sbr.rel (%p250) target = $region28
        $region27: #{tpu_custom_call.1} parent=11 // pred_region
          _
        $region28: #{tpu_custom_call.1} parent=11 // pred_fallthru
          _
        // Predicated region
        $region29: #{tpu_custom_call.1} parent=11 // pred_check
          %p253 = pneg %p148
        $region30: #{tpu_custom_call.1} parent=11 // pred_check_branch
          %255 = sbr.rel (%p253) target = $region32
        $region31: #{tpu_custom_call.1} parent=11 // pred_region
          _
        $region32: #{tpu_custom_call.1} parent=11 // pred_fallthru
          _
      $region12: #{tpu_custom_call.1} parent=5 // pred_fallthru
        _
      %p256 = scmp.lt.s32.totalorder %s17, 2
      // Predicated region
      $region33: #{tpu_custom_call.1} parent=5 // pred_check
        %p257 = pneg %p256
      $region34: #{tpu_custom_call.1} parent=5 // pred_check_branch
        %259 = sbr.rel (%p257) target = $region36
      $region35: #{tpu_custom_call.1} parent=5 // pred_region
        // Predicated region
        $region37: #{tpu_custom_call.1} parent=35 // pred_check
          %p260 = pneg %p37
        $region38: #{tpu_custom_call.1} parent=35 // pred_check_branch
          %262 = sbr.rel (%p260) target = $region40
        $region39: #{tpu_custom_call.1} parent=35 // pred_region
          %p263 = scmp.lt.s32.totalorder %s17, 1
          %s264 = scalar_select %p263, %s17, 1
          %s265 = smul.addr %s264, 6
          %s266 = smul.addr %s265, 4
          %s267 = scalar_lea.vmem %s0, %s266
        $region40: #{tpu_custom_call.1} parent=35 // pred_fallthru
          _
        // Predicated region
        $region41: #{tpu_custom_call.1} parent=35 // pred_check
          %p268 = pneg %p168
        $region42: #{tpu_custom_call.1} parent=35 // pred_check_branch
          %270 = sbr.rel (%p268) target = $region44
        $region43: #{tpu_custom_call.1} parent=35 // pred_region
          %p271 = scmp.lt.s32.totalorder %s17, 1
          %s272 = scalar_select %p271, %s17, 1
          %s273 = smul.addr %s272, 2
          %s274 = smul.addr %s273, 8
          %s275 = scalar_lea.vmem %s6, %s274
        $region44: #{tpu_custom_call.1} parent=35 // pred_fallthru
          _
        // Predicated region
        $region45: #{tpu_custom_call.1} parent=35 // pred_check
          %p276 = pneg %p194
        $region46: #{tpu_custom_call.1} parent=35 // pred_check_branch
          %278 = sbr.rel (%p276) target = $region48
        $region47: #{tpu_custom_call.1} parent=35 // pred_region
          %p279 = scmp.lt.s32.totalorder %s17, 1
          %s280 = scalar_select %p279, %s17, 1
          %s281 = smul.addr %s280, 2
          %s282 = smul.addr %s281, 8
          %s283 = scalar_lea.vmem %s7, %s282
        $region48: #{tpu_custom_call.1} parent=35 // pred_fallthru
          _
      $region36: #{tpu_custom_call.1} parent=5 // pred_fallthru
        _
      %p284 = scmp.le.s32.totalorder 1, %s17
      %p285 = scmp.lt.s32.totalorder %s17, 3
      %p286 = pnand %p284, %p285
      %p287 = pneg %p286
      // Predicated region
      $region49: #{tpu_custom_call.1} parent=5 // pred_check
        _
      $region50: #{tpu_custom_call.1} parent=5 // pred_check_branch
        %289 = sbr.rel (%p286) target = $region52
      $region51: #{tpu_custom_call.1} parent=5 // pred_region
        %s290 = ssub.s32 %s17, 1
        %p291 = scmp.lt.s32.totalorder %s22, 1
        %s292 = scalar_select %p291, %s22, 1
        %s293 = smul.addr %s292, 6
        %s294 = smul.addr %s293, 4
        %s295 = scalar_lea.vmem %s0, %s294
        %p296 = pneg %p43
        %p297 = pneg %p40
        %p298 = pneg %p64
        %p299 = pneg %p61
        %p300 = pneg %p85
        %p301 = pneg %p82
        %p302 = pneg %p106
        %p303 = pneg %p103
        %p304 = pneg %p127
        %p305 = pneg %p124
        %p306 = pneg %p148
        %p307 = pneg %p145
        %p308 = scmp.lt.s32.totalorder %s22, 1
        %s309 = scalar_select %p308, %s22, 1
        %s310 = smul.addr %s309, 2
        %s311 = smul.addr %s310, 8
        %s312 = scalar_lea.vmem %s6, %s311
        %p313 = pneg %p174
        %p314 = pneg %p171
        %p315 = scmp.lt.s32.totalorder %s22, 1
        %s316 = scalar_select %p315, %s22, 1
        %s317 = smul.addr %s316, 2
        %s318 = smul.addr %s317, 8
        %s319 = scalar_lea.vmem %s7, %s318
        %p320 = pneg %p200
        %p321 = pneg %p197
        %p322 = pneg %p226
        %p323 = pneg %p223
        %s324 = sand.u32 %s213, 1
        %s325 = scalar_lea.sflag [#allocation4], %s324
        %s326 = sand.u32 %s213, 1
        %s327 = smul.addr %s326, 24
        %s328 = scalar_lea.vmem [#allocation3], %s327
        %p329 = scmp.lt.s32.totalorder %s22, 1
        %s330 = scalar_select %p329, %s22, 1
        %s331 = smul.addr %s330, 6
        %s332 = smul.addr %s331, 4
        %s333 = scalar_lea.vmem %s0, %s332
        %p334 = scmp.lt.s32.totalorder %s22, 1
        %s335 = scalar_select %p334, %s22, 1
        %s336 = smul.addr %s335, 2
        %s337 = smul.addr %s336, 8
        %s338 = scalar_lea.vmem %s6, %s337
        %p339 = scmp.lt.s32.totalorder %s22, 1
        %s340 = scalar_select %p339, %s22, 1
        %s341 = smul.addr %s340, 2
        %s342 = smul.addr %s341, 8
        %s343 = scalar_lea.vmem %s7, %s342
        %v345 = vld [vmem:[%s333] sm:$0xff]
        %v346 = vld [vmem:[%s333 + $0x8] sm:$0xf]
        %v347 = vld [vmem:[%s333 + $0xc] sm:$0xff]
        %v348 = vld [vmem:[%s333 + $0x14] sm:$0xf]
        %349 = vst [vmem:[#allocation2] sm:$0xff] %v345
        %vm350 = vcmask 257024
        %351 = vst.msk [vmem:[#allocation2 + $0x8] sm:$0xf] %vm350, %v346
        %352 = vst [vmem:[#allocation2 + $0xc] sm:$0xff] %v347
        %353 = vst.msk [vmem:[#allocation2 + $0x14] sm:$0xf] %vm350, %v348
        %v354 = vld [vmem:[%s333] sm:$0xff]
        %v355 = vld [vmem:[%s333 + $0x8] sm:$0xf]
        %v356 = vld [vmem:[%s333 + $0xc] sm:$0xff]
        %v357 = vld [vmem:[%s333 + $0x14] sm:$0xf]
        %362 = vrot.lane.b32.xlu0 %v354, 127
        %v363 = vpop.permute.xlu0 %362
        %364 = vrot.lane.b32.xlu0 %v355, 127
        %v365 = vpop.permute.xlu0 %364
        %366 = vrot.lane.b32.xlu0 %v356, 127
        %v367 = vpop.permute.xlu0 %366
        %368 = vrot.lane.b32.xlu0 %v357, 127
        %v369 = vpop.permute.xlu0 %368
        %v370 = vrot.slane %v363, 4
        %v371 = vrot.slane %v365, 4
        %v372 = vrot.slane %v367, 4
        %v373 = vrot.slane %v369, 4
        %vm374 = vcmask 1043456
        %v375 = vsel %vm374, %v370, %v371
        %vm376 = vcmask 1039360
        %v377 = vsel %vm376, %v363, %v375
        %v378 = vsel %vm374, %v372, %v373
        %v379 = vsel %vm376, %v367, %v378
        %384 = vst [vmem:[#allocation2 + $0x18] sm:$0xff] %v377
        %385 = vst.msk [vmem:[#allocation2 + $0x20] sm:$0xf] %vm350, %v365
        %386 = vst [vmem:[#allocation2 + $0x24] sm:$0xff] %v379
        %387 = vst.msk [vmem:[#allocation2 + $0x2c] sm:$0xf] %vm350, %v369
        %v388 = vld [vmem:[%s333] sm:$0xff]
        %v389 = vld [vmem:[%s333 + $0x8] sm:$0xf]
        %v390 = vld [vmem:[%s333 + $0xc] sm:$0xff]
        %v391 = vld [vmem:[%s333 + $0x14] sm:$0xf]
        %396 = vrot.lane.b32.xlu0 %v388, 126
        %v397 = vpop.permute.xlu0 %396
        %398 = vrot.lane.b32.xlu0 %v389, 126
        %v399 = vpop.permute.xlu0 %398
        %400 = vrot.lane.b32.xlu0 %v390, 126
        %v401 = vpop.permute.xlu0 %400
        %402 = vrot.lane.b32.xlu0 %v391, 126
        %v403 = vpop.permute.xlu0 %402
        %v404 = vrot.slane %v397, 4
        %v405 = vrot.slane %v399, 4
        %v406 = vrot.slane %v401, 4
        %v407 = vrot.slane %v403, 4
        %v408 = vsel %vm374, %v404, %v405
        %vm409 = vcmask 1031168
        %v410 = vsel %vm409, %v397, %v408
        %v411 = vsel %vm374, %v406, %v407
        %v412 = vsel %vm409, %v401, %v411
        %417 = vst [vmem:[#allocation2 + $0x30] sm:$0xff] %v410
        %418 = vst.msk [vmem:[#allocation2 + $0x38] sm:$0xf] %vm350, %v399
        %419 = vst [vmem:[#allocation2 + $0x3c] sm:$0xff] %v412
        %420 = vst.msk [vmem:[#allocation2 + $0x44] sm:$0xf] %vm350, %v403
        %v421 = vld [vmem:[%s333] sm:$0xff]
        %v422 = vld [vmem:[%s333 + $0x8] sm:$0xf]
        %v423 = vld [vmem:[%s333 + $0xc] sm:$0xff]
        %v424 = vld [vmem:[%s333 + $0x14] sm:$0xf]
        %429 = vrot.lane.b32.xlu0 %v421, 110
        %v430 = vpop.permute.xlu0 %429
        %431 = vrot.lane.b32.xlu0 %v422, 110
        %v432 = vpop.permute.xlu0 %431
        %433 = vrot.lane.b32.xlu0 %v423, 110
        %v434 = vpop.permute.xlu0 %433
        %435 = vrot.lane.b32.xlu0 %v424, 110
        %v436 = vpop.permute.xlu0 %435
        %v437 = vrot.slane %v430, 4
        %v438 = vrot.slane %v432, 4
        %v439 = vrot.slane %v434, 4
        %v440 = vrot.slane %v436, 4
        %v441 = vsel %vm374, %v437, %v438
        %vm442 = vcmask 900096
        %v443 = vsel %vm442, %v430, %v441
        %v444 = vsel %vm374, %v439, %v440
        %v445 = vsel %vm442, %v434, %v444
        %450 = vst [vmem:[#allocation2 + $0x48] sm:$0xff] %v443
        %451 = vst.msk [vmem:[#allocation2 + $0x50] sm:$0xf] %vm350, %v432
        %452 = vst [vmem:[#allocation2 + $0x54] sm:$0xff] %v445
        %453 = vst.msk [vmem:[#allocation2 + $0x5c] sm:$0xf] %vm350, %v436
        %v454 = vld [vmem:[%s333] sm:$0xff]
        %v455 = vld [vmem:[%s333 + $0x8] sm:$0xf]
        %v456 = vld [vmem:[%s333 + $0xc] sm:$0xff]
        %v457 = vld [vmem:[%s333 + $0x14] sm:$0xf]
        %462 = vrot.lane.b32.xlu0 %v454, 109
        %v463 = vpop.permute.xlu0 %462
        %464 = vrot.lane.b32.xlu0 %v455, 109
        %v465 = vpop.permute.xlu0 %464
        %466 = vrot.lane.b32.xlu0 %v456, 109
        %v467 = vpop.permute.xlu0 %466
        %468 = vrot.lane.b32.xlu0 %v457, 109
        %v469 = vpop.permute.xlu0 %468
        %v470 = vrot.slane %v463, 4
        %v471 = vrot.slane %v465, 4
        %v472 = vrot.slane %v467, 4
        %v473 = vrot.slane %v469, 4
        %v474 = vsel %vm374, %v470, %v471
        %vm475 = vcmask 891904
        %v476 = vsel %vm475, %v463, %v474
        %v477 = vsel %vm374, %v472, %v473
        %v478 = vsel %vm475, %v467, %v477
        %483 = vst [vmem:[#allocation2 + $0x60] sm:$0xff] %v476
        %484 = vst.msk [vmem:[#allocation2 + $0x68] sm:$0xf] %vm350, %v465
        %485 = vst [vmem:[#allocation2 + $0x6c] sm:$0xff] %v478
        %486 = vst.msk [vmem:[#allocation2 + $0x74] sm:$0xf] %vm350, %v469
        %v487 = vld [vmem:[%s333] sm:$0xff]
        %v488 = vld [vmem:[%s333 + $0x8] sm:$0xf]
        %v489 = vld [vmem:[%s333 + $0xc] sm:$0xff]
        %v490 = vld [vmem:[%s333 + $0x14] sm:$0xf]
        %495 = vrot.lane.b32.xlu0 %v487, 108
        %v496 = vpop.permute.xlu0 %495
        %497 = vrot.lane.b32.xlu0 %v488, 108
        %v498 = vpop.permute.xlu0 %497
        %499 = vrot.lane.b32.xlu0 %v489, 108
        %v500 = vpop.permute.xlu0 %499
        %501 = vrot.lane.b32.xlu0 %v490, 108
        %v502 = vpop.permute.xlu0 %501
        %v503 = vrot.slane %v496, 4
        %v504 = vrot.slane %v498, 4
        %v505 = vrot.slane %v500, 4
        %v506 = vrot.slane %v502, 4
        %v507 = vsel %vm374, %v503, %v504
        %vm508 = vcmask 883712
        %v509 = vsel %vm508, %v496, %v507
        %v510 = vsel %vm374, %v505, %v506
        %v511 = vsel %vm508, %v500, %v510
        %516 = vst [vmem:[#allocation2 + $0x78] sm:$0xff] %v509
        %517 = vst.msk [vmem:[#allocation2 + $0x80] sm:$0xf] %vm350, %v498
        %518 = vst [vmem:[#allocation2 + $0x84] sm:$0xff] %v511
        %519 = vst.msk [vmem:[#allocation2 + $0x8c] sm:$0xf] %vm350, %v502
        %v520 = vld [vmem:[%s333] sm:$0xff]
        %v521 = vld [vmem:[%s333 + $0x8] sm:$0xf]
        %v522 = vld [vmem:[%s333 + $0xc] sm:$0xff]
        %v523 = vld [vmem:[%s333 + $0x14] sm:$0xf]
        %528 = vrot.lane.b32.xlu0 %v520, 92
        %v529 = vpop.permute.xlu0 %528
        %530 = vrot.lane.b32.xlu0 %v521, 92
        %v531 = vpop.permute.xlu0 %530
        %532 = vrot.lane.b32.xlu0 %v522, 92
        %v533 = vpop.permute.xlu0 %532
        %534 = vrot.lane.b32.xlu0 %v523, 92
        %v535 = vpop.permute.xlu0 %534
        %v536 = vrot.slane %v529, 4
        %v537 = vrot.slane %v531, 4
        %v538 = vrot.slane %v533, 4
        %v539 = vrot.slane %v535, 4
        %v540 = vsel %vm374, %v536, %v537
        %vm541 = vcmask 752640
        %v542 = vsel %vm541, %v529, %v540
        %v543 = vsel %vm374, %v538, %v539
        %v544 = vsel %vm541, %v533, %v543
        %549 = vst [vmem:[#allocation2 + $0x90] sm:$0xff] %v542
        %550 = vst.msk [vmem:[#allocation2 + $0x98] sm:$0xf] %vm350, %v531
        %551 = vst [vmem:[#allocation2 + $0x9c] sm:$0xff] %v544
        %552 = vst.msk [vmem:[#allocation2 + $0xa4] sm:$0xf] %vm350, %v535
        %v553 = vld [vmem:[%s333] sm:$0xff]
        %v554 = vld [vmem:[%s333 + $0x8] sm:$0xf]
        %v555 = vld [vmem:[%s333 + $0xc] sm:$0xff]
        %v556 = vld [vmem:[%s333 + $0x14] sm:$0xf]
        %561 = vrot.lane.b32.xlu0 %v553, 91
        %v562 = vpop.permute.xlu0 %561
        %563 = vrot.lane.b32.xlu0 %v554, 91
        %v564 = vpop.permute.xlu0 %563
        %565 = vrot.lane.b32.xlu0 %v555, 91
        %v566 = vpop.permute.xlu0 %565
        %567 = vrot.lane.b32.xlu0 %v556, 91
        %v568 = vpop.permute.xlu0 %567
        %v569 = vrot.slane %v562, 4
        %v570 = vrot.slane %v564, 4
        %v571 = vrot.slane %v566, 4
        %v572 = vrot.slane %v568, 4
        %v573 = vsel %vm374, %v569, %v570
        %vm574 = vcmask 744448
        %v575 = vsel %vm574, %v562, %v573
        %v576 = vsel %vm374, %v571, %v572
        %v577 = vsel %vm574, %v566, %v576
        %582 = vst [vmem:[#allocation2 + $0xa8] sm:$0xff] %v575
        %583 = vst.msk [vmem:[#allocation2 + $0xb0] sm:$0xf] %vm350, %v564
        %584 = vst [vmem:[#allocation2 + $0xb4] sm:$0xff] %v577
        %585 = vst.msk [vmem:[#allocation2 + $0xbc] sm:$0xf] %vm350, %v568
        %v586 = vld [vmem:[%s333] sm:$0xff]
        %v587 = vld [vmem:[%s333 + $0x8] sm:$0xf]
        %v588 = vld [vmem:[%s333 + $0xc] sm:$0xff]
        %v589 = vld [vmem:[%s333 + $0x14] sm:$0xf]
        %594 = vrot.lane.b32.xlu0 %v586, 90
        %v595 = vpop.permute.xlu0 %594
        %596 = vrot.lane.b32.xlu0 %v587, 90
        %v597 = vpop.permute.xlu0 %596
        %598 = vrot.lane.b32.xlu0 %v588, 90
        %v599 = vpop.permute.xlu0 %598
        %600 = vrot.lane.b32.xlu0 %v589, 90
        %v601 = vpop.permute.xlu0 %600
        %v602 = vrot.slane %v595, 4
        %v603 = vrot.slane %v597, 4
        %v604 = vrot.slane %v599, 4
        %v605 = vrot.slane %v601, 4
        %v606 = vsel %vm374, %v602, %v603
        %vm607 = vcmask 736256
        %v608 = vsel %vm607, %v595, %v606
        %v609 = vsel %vm374, %v604, %v605
        %v610 = vsel %vm607, %v599, %v609
        %615 = vst [vmem:[#allocation2 + $0xc0] sm:$0xff] %v608
        %616 = vst.msk [vmem:[#allocation2 + $0xc8] sm:$0xf] %vm350, %v597
        %617 = vst [vmem:[#allocation2 + $0xcc] sm:$0xff] %v610
        %618 = vst.msk [vmem:[#allocation2 + $0xd4] sm:$0xf] %vm350, %v601
        %v619 = vld [vmem:[%s1] sm:$0xff]
        %v620 = vld [vmem:[%s1 + $0x8] sm:$0xff]
        %v621 = vld [vmem:[#allocation2] sm:$0xff]
        %v622 = vld [vmem:[#allocation2 + $0x8] sm:$0xf]
        %v623 = vld [vmem:[#allocation2 + $0xc] sm:$0xff]
        %v624 = vld [vmem:[#allocation2 + $0x14] sm:$0xf]
        %v625 = vld [vmem:[#allocation2 + $0x18] sm:$0xff]
        %v626 = vld [vmem:[#allocation2 + $0x20] sm:$0xf]
        %v627 = vld [vmem:[#allocation2 + $0x24] sm:$0xff]
        %v628 = vld [vmem:[#allocation2 + $0x2c] sm:$0xf]
        %v629 = vld [vmem:[#allocation2 + $0x30] sm:$0xff]
        %v630 = vld [vmem:[#allocation2 + $0x38] sm:$0xf]
        %v631 = vld [vmem:[#allocation2 + $0x3c] sm:$0xff]
        %v632 = vld [vmem:[#allocation2 + $0x44] sm:$0xf]
        %v633 = vld [vmem:[#allocation2 + $0x48] sm:$0xff]
        %v634 = vld [vmem:[#allocation2 + $0x50] sm:$0xf]
        %v635 = vld [vmem:[#allocation2 + $0x54] sm:$0xff]
        %v636 = vld [vmem:[#allocation2 + $0x5c] sm:$0xf]
        %v637 = vld [vmem:[#allocation2 + $0x60] sm:$0xff]
        %v638 = vld [vmem:[#allocation2 + $0x68] sm:$0xf]
        %v639 = vld [vmem:[#allocation2 + $0x6c] sm:$0xff]
        %v640 = vld [vmem:[#allocation2 + $0x74] sm:$0xf]
        %v641 = vld [vmem:[#allocation2 + $0x78] sm:$0xff]
        %v642 = vld [vmem:[#allocation2 + $0x80] sm:$0xf]
        %v643 = vld [vmem:[#allocation2 + $0x84] sm:$0xff]
        %v644 = vld [vmem:[#allocation2 + $0x8c] sm:$0xf]
        %v645 = vld [vmem:[#allocation2 + $0x90] sm:$0xff]
        %v646 = vld [vmem:[#allocation2 + $0x98] sm:$0xf]
        %v647 = vld [vmem:[#allocation2 + $0x9c] sm:$0xff]
        %v648 = vld [vmem:[#allocation2 + $0xa4] sm:$0xf]
        %v649 = vld [vmem:[#allocation2 + $0xa8] sm:$0xff]
        %v650 = vld [vmem:[#allocation2 + $0xb0] sm:$0xf]
        %v651 = vld [vmem:[#allocation2 + $0xb4] sm:$0xff]
        %v652 = vld [vmem:[#allocation2 + $0xbc] sm:$0xf]
        %v653 = vld [vmem:[#allocation2 + $0xc0] sm:$0xff]
        %v654 = vld [vmem:[#allocation2 + $0xc8] sm:$0xf]
        %v655 = vld [vmem:[#allocation2 + $0xcc] sm:$0xff]
        %v656 = vld [vmem:[#allocation2 + $0xd4] sm:$0xf]
        %v657 = vld [vmem:[%s2] sm:$0xff]
        %v658 = vld [vmem:[%s2 + $0x8] sm:$0xff]
        %660 = vset.pattern.permute.xlu0 0
        %661 = vperm.xlu0 %660, %v657
        %v662 = vpop.permute.xlu0 %661
        %665 = vset.pattern.permute.xlu0 0
        %666 = vperm.xlu0 %665, %v658
        %v667 = vpop.permute.xlu0 %666
        %v671 = vunpack.c.l.b16 %v619
        %v672 = vunpack.c.h.b16 %v619
        %v673 = vunpack.c.l.b16 %v620
        %v674 = vunpack.c.h.b16 %v620
        %v675 = vpack.c.b16 %v673, %v671
        %v676 = vpack.c.b16 %v674, %v672
        %v714 = vunpack.c.l.b16 %v621
        %v715 = vunpack.c.h.b16 %v621
        %v716 = vunpack.c.l.b16 %v622
        %v717 = vunpack.c.l.b16 %v623
        %v718 = vunpack.c.h.b16 %v623
        %v719 = vunpack.c.l.b16 %v624
        %v720 = vunpack.c.l.b16 %v625
        %v721 = vunpack.c.h.b16 %v625
        %v722 = vunpack.c.l.b16 %v626
        %v723 = vunpack.c.l.b16 %v627
        %v724 = vunpack.c.h.b16 %v627
        %v725 = vunpack.c.l.b16 %v628
        %v726 = vunpack.c.l.b16 %v629
        %v727 = vunpack.c.h.b16 %v629
        %v728 = vunpack.c.l.b16 %v630
        %v729 = vunpack.c.l.b16 %v631
        %v730 = vunpack.c.h.b16 %v631
        %v731 = vunpack.c.l.b16 %v632
        %v732 = vunpack.c.l.b16 %v633
        %v733 = vunpack.c.h.b16 %v633
        %v734 = vunpack.c.l.b16 %v634
        %v735 = vunpack.c.l.b16 %v635
        %v736 = vunpack.c.h.b16 %v635
        %v737 = vunpack.c.l.b16 %v636
        %v738 = vunpack.c.l.b16 %v637
        %v739 = vunpack.c.h.b16 %v637
        %v740 = vunpack.c.l.b16 %v638
        %v741 = vunpack.c.l.b16 %v639
        %v742 = vunpack.c.h.b16 %v639
        %v743 = vunpack.c.l.b16 %v640
        %v744 = vunpack.c.l.b16 %v641
        %v745 = vunpack.c.h.b16 %v641
        %v746 = vunpack.c.l.b16 %v642
        %v747 = vunpack.c.l.b16 %v643
        %v748 = vunpack.c.h.b16 %v643
        %v749 = vunpack.c.l.b16 %v644
        %v750 = vunpack.c.l.b16 %v645
        %v751 = vunpack.c.h.b16 %v645
        %v752 = vunpack.c.l.b16 %v646
        %v753 = vunpack.c.l.b16 %v647
        %v754 = vunpack.c.h.b16 %v647
        %v755 = vunpack.c.l.b16 %v648
        %v756 = vunpack.c.l.b16 %v649
        %v757 = vunpack.c.h.b16 %v649
        %v758 = vunpack.c.l.b16 %v650
        %v759 = vunpack.c.l.b16 %v651
        %v760 = vunpack.c.h.b16 %v651
        %v761 = vunpack.c.l.b16 %v652
        %v762 = vunpack.c.l.b16 %v653
        %v763 = vunpack.c.h.b16 %v653
        %v764 = vunpack.c.l.b16 %v654
        %v765 = vunpack.c.l.b16 %v655
        %v766 = vunpack.c.h.b16 %v655
        %v767 = vunpack.c.l.b16 %v656
        %v768 = vpack.c.b16 %v717, %v714
        %v769 = vpack.c.b16 %v718, %v715
        %v770 = vpack.c.b16 %v719, %v716
        %v771 = vpack.c.b16 %v723, %v720
        %v772 = vpack.c.b16 %v724, %v721
        %v773 = vpack.c.b16 %v725, %v722
        %v774 = vpack.c.b16 %v729, %v726
        %v775 = vpack.c.b16 %v730, %v727
        %v776 = vpack.c.b16 %v731, %v728
        %v777 = vpack.c.b16 %v735, %v732
        %v778 = vpack.c.b16 %v736, %v733
        %v779 = vpack.c.b16 %v737, %v734
        %v780 = vpack.c.b16 %v741, %v738
        %v781 = vpack.c.b16 %v742, %v739
        %v782 = vpack.c.b16 %v743, %v740
        %v783 = vpack.c.b16 %v747, %v744
        %v784 = vpack.c.b16 %v748, %v745
        %v785 = vpack.c.b16 %v749, %v746
        %v786 = vpack.c.b16 %v753, %v750
        %v787 = vpack.c.b16 %v754, %v751
        %v788 = vpack.c.b16 %v755, %v752
        %v789 = vpack.c.b16 %v759, %v756
        %v790 = vpack.c.b16 %v760, %v757
        %v791 = vpack.c.b16 %v761, %v758
        %v792 = vpack.c.b16 %v765, %v762
        %v793 = vpack.c.b16 %v766, %v763
        %v794 = vpack.c.b16 %v767, %v764
        %vm822 = vcmask 130048
        %v824 = vsel %vm822, %v676, 0
        %826 = vmatprep.subr.bf16.mxu0 %v790
        %827 = vmatpush1.bf16.msra.mxu0 %v789
        %828 = vmatprep.subr.bf16.mxu0 %v787
        %829 = vmatpush1.bf16.msra.mxu0 %v786
        %830 = vmatprep.subr.bf16.mxu0 %v784
        %831 = vmatpush1.bf16.msra.mxu0 %v783
        %832 = vmatprep.subr.bf16.mxu0 %v781
        %833 = vmatpush1.bf16.msra.mxu0 %v780
        %834 = vmatprep.subr.bf16.mxu0 %v778
        %835 = vmatpush1.bf16.msra.mxu0 %v777
        %836 = vmatprep.subr.bf16.mxu0 %v775
        %837 = vmatpush1.bf16.msra.mxu0 %v774
        %838 = vmatprep.subr.bf16.mxu0 %v772
        %839 = vmatpush1.bf16.msra.mxu0 %v771
        %840 = vmatprep.subr.bf16.mxu0 %v769
        %841 = vmatpush1.bf16.msra.mxu0 %v768
        %842 = vmatprep.subr.bf16.mxu0 0
        %843 = vmatpush2.bf16.msra.mxu0 0
        %844 = vmatprep.subr.bf16.mxu0 0
        %845 = vmatpush2.bf16.msra.mxu0 0
        %846 = vmatprep.subr.bf16.mxu0 0
        %847 = vmatpush2.bf16.msra.mxu0 0
        %848 = vmatprep.subr.bf16.mxu0 0
        %849 = vmatpush2.bf16.msra.mxu0 0
        %850 = vmatprep.subr.bf16.mxu0 0
        %851 = vmatpush2.bf16.msra.mxu0 0
        %852 = vmatprep.subr.bf16.mxu0 0
        %853 = vmatpush2.bf16.msra.mxu0 0
        %854 = vmatprep.subr.bf16.mxu0 0
        %855 = vmatpush2.bf16.msra.mxu0 0
        %856 = vmatprep.subr.bf16.mxu0 %v793
        %857 = vmatpush2.bf16.msra.mxu0 %v792
        %858 = vmatprep.mubr.bf16.mxu0 %v824
        %859 = vmatmul.mubr.bf16.gmra.mxu0 %v675
        %v860 = vpop.f32.mrf.mxu0
        %v861 = vadd.f32 %v662, %v860
        %v862 = vpop.f32.mrf.mxu0
        %v863 = vadd.f32 %v662, %v862
        %v864 = vpop.f32.mrf.mxu0
        %v865 = vadd.f32 %v667, %v864
        %v866 = vpop.f32.mrf.mxu0
        %v867 = vadd.f32 %v667, %v866
        %868 = vdwg.mxu0
        %869 = vmatprep.subr.bf16.mxu0 0
        %870 = vmatpush1.bf16.msra.mxu0 %v791
        %871 = vmatprep.subr.bf16.mxu0 0
        %872 = vmatpush1.bf16.msra.mxu0 %v788
        %873 = vmatprep.subr.bf16.mxu0 0
        %874 = vmatpush1.bf16.msra.mxu0 %v785
        %875 = vmatprep.subr.bf16.mxu0 0
        %876 = vmatpush1.bf16.msra.mxu0 %v782
        %877 = vmatprep.subr.bf16.mxu0 0
        %878 = vmatpush1.bf16.msra.mxu0 %v779
        %879 = vmatprep.subr.bf16.mxu0 0
        %880 = vmatpush1.bf16.msra.mxu0 %v776
        %881 = vmatprep.subr.bf16.mxu0 0
        %882 = vmatpush1.bf16.msra.mxu0 %v773
        %883 = vmatprep.subr.bf16.mxu0 0
        %884 = vmatpush1.bf16.msra.mxu0 %v770
        %885 = vmatprep.subr.bf16.mxu0 0
        %886 = vmatpush2.bf16.msra.mxu0 0
        %887 = vmatprep.subr.bf16.mxu0 0
        %888 = vmatpush2.bf16.msra.mxu0 0
        %889 = vmatprep.subr.bf16.mxu0 0
        %890 = vmatpush2.bf16.msra.mxu0 0
        %891 = vmatprep.subr.bf16.mxu0 0
        %892 = vmatpush2.bf16.msra.mxu0 0
        %893 = vmatprep.subr.bf16.mxu0 0
        %894 = vmatpush2.bf16.msra.mxu0 0
        %895 = vmatprep.subr.bf16.mxu0 0
        %896 = vmatpush2.bf16.msra.mxu0 0
        %897 = vmatprep.subr.bf16.mxu0 0
        %898 = vmatpush2.bf16.msra.mxu0 0
        %899 = vmatprep.subr.bf16.mxu0 0
        %900 = vmatpush2.bf16.msra.mxu0 %v794
        %901 = vmatprep.mubr.bf16.mxu0 %v824
        %902 = vmatmul.mubr.bf16.gmra.mxu0 %v675
        %v903 = vpop.f32.mrf.mxu0
        %v904 = vadd.f32 %v662, %v903
        %v905 = vpop.f32.mrf.mxu0
        %v906 = vpop.f32.mrf.mxu0
        %v907 = vadd.f32 %v667, %v906
        %v908 = vpop.f32.mrf.mxu0
        %909 = vdwg.mxu0
        %v910 = vld [vmem:[%s5] sm:$0x7]
        %v912 = vlaneseq
        %v913 = vshrl.u32 %v912, 7
        %v914 = vsub.s32 0, %v913
        %v915 = vrot.slane %v910, %v914
        %v916 = vlaneseq
        %v917 = vshrl.u32 %v916, 7
        %v918 = vsub.s32 1, %v917
        %v919 = vrot.slane %v910, %v918
        %v920 = vlaneseq
        %v921 = vshrl.u32 %v920, 7
        %v922 = vsub.s32 2, %v921
        %v923 = vrot.slane %v910, %v922
        %v927 = vmul.f32 %v861, %v915
        %v928 = vmul.f32 %v863, %v919
        %v929 = vmul.f32 %v904, %v923
        %v930 = vmul.f32 %v865, %v915
        %v931 = vmul.f32 %v867, %v919
        %v932 = vmul.f32 %v907, %v923
        %v933 = vadd.f32 %v927, %v928
        %vm934 = vcmask 261120
        %v935 = vsel %vm934, %v929, 0.0
        %v936 = vadd.f32 %v933, %v935
        %937 = vadd.xlane.f32.xlu0 %v936
        %v938 = vpop.xlane.xlu0 %937
        %v939 = vadd.f32 %v930, %v931
        %v940 = vsel %vm934, %v932, 0.0
        %v941 = vadd.f32 %v939, %v940
        %942 = vadd.xlane.f32.xlu0 %v941
        %v943 = vpop.xlane.xlu0 %942
        %v944 = vmul.f32 %v927, %v861
        %v945 = vmul.f32 %v928, %v863
        %v946 = vmul.f32 %v929, %v904
        %v947 = vmul.f32 %v930, %v865
        %v948 = vmul.f32 %v931, %v867
        %v949 = vmul.f32 %v932, %v907
        %v950 = vadd.f32 %v944, %v945
        %v951 = vsel %vm934, %v946, 0.0
        %v952 = vadd.f32 %v950, %v951
        %953 = vadd.xlane.f32.xlu0 %v952
        %v954 = vpop.xlane.xlu0 %953
        %v955 = vadd.f32 %v947, %v948
        %v956 = vsel %vm934, %v949, 0.0
        %v957 = vadd.f32 %v955, %v956
        %958 = vadd.xlane.f32.xlu0 %v957
        %v959 = vpop.xlane.xlu0 %958
        %v960 = vlaneseq
        %v961 = vshrl.u32 %v960, 7
        %v962 = vadd.s32 %v961, 8
        %v963 = vlaneseq
        %v964 = vand.u32 %v963, 127
        %v965 = vmul.u32 %v964, 2
        %vm966 = vcmp.ge.s32.totalorder %v961, %v965
        %vm967 = vcmp.ge.s32.totalorder %v962, %v965
        %v968 = vadd.s32 %v965, 2
        %vm969 = vcmp.lt.s32.totalorder %v961, %v968
        %vm970 = vcmp.lt.s32.totalorder %v962, %v968
        %vm971 = vmand %vm966, %vm969
        %vm972 = vmand %vm967, %vm970
        %v973 = vsel %vm971, 1, 0
        %v974 = vsel %vm972, 1, 0
        %v975 = vcvt.s32.f32 %v973
        %v976 = vcvt.s32.f32 %v974
        %v977 = vmul.u32 %v961, 2
        %vm978 = vcmp.ge.s32.totalorder %v964, %v977
        %v979 = vadd.s32 %v977, 2
        %vm980 = vcmp.lt.s32.totalorder %v964, %v979
        %vm981 = vmand %vm978, %vm980
        %v982 = vsel %vm981, 1, 0
        %v983 = vcvt.s32.f32 %v982
        %v985 = vsel %vm822, %v983, 0
        %987 = vmatprep.subr.mxu0 0.0
        %988 = vmatpush1.msra.mxu0 0.0
        %989 = vmatprep.subr.mxu0 0.0
        %990 = vmatpush1.msra.mxu0 0.0
        %991 = vmatprep.subr.mxu0 0.0
        %992 = vmatpush1.msra.mxu0 0.0
        %993 = vmatprep.subr.mxu0 0.0
        %994 = vmatpush1.msra.mxu0 0.0
        %995 = vmatprep.subr.mxu0 0.0
        %996 = vmatpush1.msra.mxu0 0.0
        %997 = vmatprep.subr.mxu0 0.0
        %998 = vmatpush1.msra.mxu0 0.0
        %999 = vmatprep.subr.mxu0 0.0
        %1000 = vmatpush1.msra.mxu0 0.0
        %1001 = vmatprep.subr.mxu0 0.0
        %1002 = vmatpush1.msra.mxu0 0.0
        %1003 = vmatprep.subr.mxu0 0.0
        %1004 = vmatpush1.msra.mxu0 0.0
        %1005 = vmatprep.subr.mxu0 0.0
        %1006 = vmatpush1.msra.mxu0 0.0
        %1007 = vmatprep.subr.mxu0 0.0
        %1008 = vmatpush1.msra.mxu0 0.0
        %1009 = vmatprep.subr.mxu0 0.0
        %1010 = vmatpush1.msra.mxu0 0.0
        %1011 = vmatprep.subr.mxu0 0.0
        %1012 = vmatpush1.msra.mxu0 0.0
        %1013 = vmatprep.subr.mxu0 0.0
        %1014 = vmatpush1.msra.mxu0 0.0
        %1015 = vmatprep.subr.mxu0 0.0
        %1016 = vmatpush1.msra.mxu0 %v943
        %1017 = vmatprep.subr.mxu0 0.0
        %1018 = vmatpush1.msra.mxu0 %v938
        %1019 = vmatprep.subr.mxu0 0.0
        %1020 = vmatpush2.msra.mxu0 0.0
        %1021 = vmatprep.subr.mxu0 0.0
        %1022 = vmatpush2.msra.mxu0 0.0
        %1023 = vmatprep.subr.mxu0 0.0
        %1024 = vmatpush2.msra.mxu0 0.0
        %1025 = vmatprep.subr.mxu0 0.0
        %1026 = vmatpush2.msra.mxu0 0.0
        %1027 = vmatprep.subr.mxu0 0.0
        %1028 = vmatpush2.msra.mxu0 0.0
        %1029 = vmatprep.subr.mxu0 0.0
        %1030 = vmatpush2.msra.mxu0 0.0
        %1031 = vmatprep.subr.mxu0 0.0
        %1032 = vmatpush2.msra.mxu0 0.0
        %1033 = vmatprep.subr.mxu0 0.0
        %1034 = vmatpush2.msra.mxu0 0.0
        %1035 = vmatprep.subr.mxu0 0.0
        %1036 = vmatpush2.msra.mxu0 0.0
        %1037 = vmatprep.subr.mxu0 0.0
        %1038 = vmatpush2.msra.mxu0 0.0
        %1039 = vmatprep.subr.mxu0 0.0
        %1040 = vmatpush2.msra.mxu0 0.0
        %1041 = vmatprep.subr.mxu0 0.0
        %1042 = vmatpush2.msra.mxu0 0.0
        %1043 = vmatprep.subr.mxu0 0.0
        %1044 = vmatpush2.msra.mxu0 0.0
        %1045 = vmatprep.subr.mxu0 0.0
        %1046 = vmatpush2.msra.mxu0 0.0
        %1047 = vmatprep.subr.mxu0 0.0
        %1048 = vmatpush2.msra.mxu0 0.0
        %1049 = vmatprep.subr.mxu0 0.0
        %1050 = vmatpush2.msra.mxu0 0.0
        %1051 = vmatprep.mubr.f32.mxu0 0.0
        %1052 = vmatmul.mubr.f32.gmra.mxu0 %v985
        %v1053 = vpop.f32.mrf.mxu0
        %v1054 = vadd.f32 0.0, %v1053
        %v1055 = vpop.f32.mrf.mxu0
        %1056 = vdwg.mxu0
        %1057 = vmatprep.subr.mxu0 0.0
        %1058 = vmatpush1.msra.mxu0 0.0
        %1059 = vmatprep.subr.mxu0 0.0
        %1060 = vmatpush1.msra.mxu0 0.0
        %1061 = vmatprep.subr.mxu0 0.0
        %1062 = vmatpush1.msra.mxu0 0.0
        %1063 = vmatprep.subr.mxu0 0.0
        %1064 = vmatpush1.msra.mxu0 0.0
        %1065 = vmatprep.subr.mxu0 0.0
        %1066 = vmatpush1.msra.mxu0 0.0
        %1067 = vmatprep.subr.mxu0 0.0
        %1068 = vmatpush1.msra.mxu0 0.0
        %1069 = vmatprep.subr.mxu0 0.0
        %1070 = vmatpush1.msra.mxu0 0.0
        %1071 = vmatprep.subr.mxu0 0.0
        %1072 = vmatpush1.msra.mxu0 0.0
        %1073 = vmatprep.subr.mxu0 0.0
        %1074 = vmatpush1.msra.mxu0 0.0
        %1075 = vmatprep.subr.mxu0 0.0
        %1076 = vmatpush1.msra.mxu0 0.0
        %1077 = vmatprep.subr.mxu0 0.0
        %1078 = vmatpush1.msra.mxu0 0.0
        %1079 = vmatprep.subr.mxu0 0.0
        %1080 = vmatpush1.msra.mxu0 0.0
        %1081 = vmatprep.subr.mxu0 0.0
        %1082 = vmatpush1.msra.mxu0 0.0
        %1083 = vmatprep.subr.mxu0 0.0
        %1084 = vmatpush1.msra.mxu0 0.0
        %1085 = vmatprep.subr.mxu0 0.0
        %1086 = vmatpush1.msra.mxu0 %v959
        %1087 = vmatprep.subr.mxu0 0.0
        %1088 = vmatpush1.msra.mxu0 %v954
        %1089 = vmatprep.subr.mxu0 0.0
        %1090 = vmatpush2.msra.mxu0 0.0
        %1091 = vmatprep.subr.mxu0 0.0
        %1092 = vmatpush2.msra.mxu0 0.0
        %1093 = vmatprep.subr.mxu0 0.0
        %1094 = vmatpush2.msra.mxu0 0.0
        %1095 = vmatprep.subr.mxu0 0.0
        %1096 = vmatpush2.msra.mxu0 0.0
        %1097 = vmatprep.subr.mxu0 0.0
        %1098 = vmatpush2.msra.mxu0 0.0
        %1099 = vmatprep.subr.mxu0 0.0
        %1100 = vmatpush2.msra.mxu0 0.0
        %1101 = vmatprep.subr.mxu0 0.0
        %1102 = vmatpush2.msra.mxu0 0.0
        %1103 = vmatprep.subr.mxu0 0.0
        %1104 = vmatpush2.msra.mxu0 0.0
        %1105 = vmatprep.subr.mxu0 0.0
        %1106 = vmatpush2.msra.mxu0 0.0
        %1107 = vmatprep.subr.mxu0 0.0
        %1108 = vmatpush2.msra.mxu0 0.0
        %1109 = vmatprep.subr.mxu0 0.0
        %1110 = vmatpush2.msra.mxu0 0.0
        %1111 = vmatprep.subr.mxu0 0.0
        %1112 = vmatpush2.msra.mxu0 0.0
        %1113 = vmatprep.subr.mxu0 0.0
        %1114 = vmatpush2.msra.mxu0 0.0
        %1115 = vmatprep.subr.mxu0 0.0
        %1116 = vmatpush2.msra.mxu0 0.0
        %1117 = vmatprep.subr.mxu0 0.0
        %1118 = vmatpush2.msra.mxu0 0.0
        %1119 = vmatprep.subr.mxu0 0.0
        %1120 = vmatpush2.msra.mxu0 0.0
        %1121 = vmatprep.mubr.f32.mxu0 0.0
        %1122 = vmatmul.mubr.f32.gmra.mxu0 %v985
        %v1123 = vpop.f32.mrf.mxu0
        %v1124 = vadd.f32 0.0, %v1123
        %v1125 = vpop.f32.mrf.mxu0
        %1126 = vdwg.mxu0
        %vm1127 = vcmask 64512
        %v1129 = vsel %vm1127, %v975, 0
        %v1132 = vsel %vm1127, %v976, 0
        %1134 = vmatprep.subr.mxu0 0.0
        %1135 = vmatpush1.msra.mxu0 0.0
        %1136 = vmatprep.subr.mxu0 0.0
        %1137 = vmatpush1.msra.mxu0 0.0
        %1138 = vmatprep.subr.mxu0 0.0
        %1139 = vmatpush1.msra.mxu0 0.0
        %1140 = vmatprep.subr.mxu0 0.0
        %1141 = vmatpush1.msra.mxu0 0.0
        %1142 = vmatprep.subr.mxu0 0.0
        %1143 = vmatpush1.msra.mxu0 0.0
        %1144 = vmatprep.subr.mxu0 0.0
        %1145 = vmatpush1.msra.mxu0 0.0
        %1146 = vmatprep.subr.mxu0 0.0
        %1147 = vmatpush1.msra.mxu0 0.0
        %1148 = vmatprep.subr.mxu0 0.0
        %1149 = vmatpush1.msra.mxu0 0.0
        %1150 = vmatprep.subr.mxu0 0.0
        %1151 = vmatpush1.msra.mxu0 0.0
        %1152 = vmatprep.subr.mxu0 0.0
        %1153 = vmatpush1.msra.mxu0 0.0
        %1154 = vmatprep.subr.mxu0 0.0
        %1155 = vmatpush1.msra.mxu0 0.0
        %1156 = vmatprep.subr.mxu0 0.0
        %1157 = vmatpush1.msra.mxu0 0.0
        %1158 = vmatprep.subr.mxu0 0.0
        %1159 = vmatpush1.msra.mxu0 0.0
        %1160 = vmatprep.subr.mxu0 0.0
        %1161 = vmatpush1.msra.mxu0 0.0
        %1162 = vmatprep.subr.mxu0 0.0
        %1163 = vmatpush1.msra.mxu0 0.0
        %1164 = vmatprep.subr.mxu0 0.0
        %1165 = vmatpush1.msra.mxu0 %v1054
        %1166 = vmatprep.subr.mxu0 0.0
        %1167 = vmatpush2.msra.mxu0 0.0
        %1168 = vmatprep.subr.mxu0 0.0
        %1169 = vmatpush2.msra.mxu0 0.0
        %1170 = vmatprep.subr.mxu0 0.0
        %1171 = vmatpush2.msra.mxu0 0.0
        %1172 = vmatprep.subr.mxu0 0.0
        %1173 = vmatpush2.msra.mxu0 0.0
        %1174 = vmatprep.subr.mxu0 0.0
        %1175 = vmatpush2.msra.mxu0 0.0
        %1176 = vmatprep.subr.mxu0 0.0
        %1177 = vmatpush2.msra.mxu0 0.0
        %1178 = vmatprep.subr.mxu0 0.0
        %1179 = vmatpush2.msra.mxu0 0.0
        %1180 = vmatprep.subr.mxu0 0.0
        %1181 = vmatpush2.msra.mxu0 0.0
        %1182 = vmatprep.subr.mxu0 0.0
        %1183 = vmatpush2.msra.mxu0 0.0
        %1184 = vmatprep.subr.mxu0 0.0
        %1185 = vmatpush2.msra.mxu0 0.0
        %1186 = vmatprep.subr.mxu0 0.0
        %1187 = vmatpush2.msra.mxu0 0.0
        %1188 = vmatprep.subr.mxu0 0.0
        %1189 = vmatpush2.msra.mxu0 0.0
        %1190 = vmatprep.subr.mxu0 0.0
        %1191 = vmatpush2.msra.mxu0 0.0
        %1192 = vmatprep.subr.mxu0 0.0
        %1193 = vmatpush2.msra.mxu0 0.0
        %1194 = vmatprep.subr.mxu0 0.0
        %1195 = vmatpush2.msra.mxu0 0.0
        %1196 = vmatprep.subr.mxu0 0.0
        %1197 = vmatpush2.msra.mxu0 0.0
        %1198 = vmatprep.mubr.f32.mxu0 0.0
        %1199 = vmatmul.mubr.f32.gmra.mxu0 %v1129
        %v1200 = vpop.f32.mrf.mxu0
        %v1201 = vadd.f32 0.0, %v1200
        %v1202 = vpop.f32.mrf.mxu0
        %1203 = vmatprep.mubr.f32.mxu0 0.0
        %1204 = vmatmul.mubr.f32.gmra.mxu0 %v1132
        %v1205 = vpop.f32.mrf.mxu0
        %v1206 = vadd.f32 0.0, %v1205
        %v1207 = vpop.f32.mrf.mxu0
        %1208 = vdwg.mxu0
        %v1209 = vrcp.pop 512.0
        %v1210 = vmul.f32 %v1201, %v1209
        %v1211 = vmul.f32 %v1206, %v1209
        %1212 = vmatprep.subr.mxu0 0.0
        %1213 = vmatpush1.msra.mxu0 0.0
        %1214 = vmatprep.subr.mxu0 0.0
        %1215 = vmatpush1.msra.mxu0 0.0
        %1216 = vmatprep.subr.mxu0 0.0
        %1217 = vmatpush1.msra.mxu0 0.0
        %1218 = vmatprep.subr.mxu0 0.0
        %1219 = vmatpush1.msra.mxu0 0.0
        %1220 = vmatprep.subr.mxu0 0.0
        %1221 = vmatpush1.msra.mxu0 0.0
        %1222 = vmatprep.subr.mxu0 0.0
        %1223 = vmatpush1.msra.mxu0 0.0
        %1224 = vmatprep.subr.mxu0 0.0
        %1225 = vmatpush1.msra.mxu0 0.0
        %1226 = vmatprep.subr.mxu0 0.0
        %1227 = vmatpush1.msra.mxu0 0.0
        %1228 = vmatprep.subr.mxu0 0.0
        %1229 = vmatpush1.msra.mxu0 0.0
        %1230 = vmatprep.subr.mxu0 0.0
        %1231 = vmatpush1.msra.mxu0 0.0
        %1232 = vmatprep.subr.mxu0 0.0
        %1233 = vmatpush1.msra.mxu0 0.0
        %1234 = vmatprep.subr.mxu0 0.0
        %1235 = vmatpush1.msra.mxu0 0.0
        %1236 = vmatprep.subr.mxu0 0.0
        %1237 = vmatpush1.msra.mxu0 0.0
        %1238 = vmatprep.subr.mxu0 0.0
        %1239 = vmatpush1.msra.mxu0 0.0
        %1240 = vmatprep.subr.mxu0 0.0
        %1241 = vmatpush1.msra.mxu0 0.0
        %1242 = vmatprep.subr.mxu0 0.0
        %1243 = vmatpush1.msra.mxu0 %v1124
        %1244 = vmatprep.subr.mxu0 0.0
        %1245 = vmatpush2.msra.mxu0 0.0
        %1246 = vmatprep.subr.mxu0 0.0
        %1247 = vmatpush2.msra.mxu0 0.0
        %1248 = vmatprep.subr.mxu0 0.0
        %1249 = vmatpush2.msra.mxu0 0.0
        %1250 = vmatprep.subr.mxu0 0.0
        %1251 = vmatpush2.msra.mxu0 0.0
        %1252 = vmatprep.subr.mxu0 0.0
        %1253 = vmatpush2.msra.mxu0 0.0
        %1254 = vmatprep.subr.mxu0 0.0
        %1255 = vmatpush2.msra.mxu0 0.0
        %1256 = vmatprep.subr.mxu0 0.0
        %1257 = vmatpush2.msra.mxu0 0.0
        %1258 = vmatprep.subr.mxu0 0.0
        %1259 = vmatpush2.msra.mxu0 0.0
        %1260 = vmatprep.subr.mxu0 0.0
        %1261 = vmatpush2.msra.mxu0 0.0
        %1262 = vmatprep.subr.mxu0 0.0
        %1263 = vmatpush2.msra.mxu0 0.0
        %1264 = vmatprep.subr.mxu0 0.0
        %1265 = vmatpush2.msra.mxu0 0.0
        %1266 = vmatprep.subr.mxu0 0.0
        %1267 = vmatpush2.msra.mxu0 0.0
        %1268 = vmatprep.subr.mxu0 0.0
        %1269 = vmatpush2.msra.mxu0 0.0
        %1270 = vmatprep.subr.mxu0 0.0
        %1271 = vmatpush2.msra.mxu0 0.0
        %1272 = vmatprep.subr.mxu0 0.0
        %1273 = vmatpush2.msra.mxu0 0.0
        %1274 = vmatprep.subr.mxu0 0.0
        %1275 = vmatpush2.msra.mxu0 0.0
        %1276 = vmatprep.mubr.f32.mxu0 0.0
        %1277 = vmatmul.mubr.f32.gmra.mxu0 %v1129
        %v1278 = vpop.f32.mrf.mxu0
        %v1279 = vadd.f32 0.0, %v1278
        %v1280 = vpop.f32.mrf.mxu0
        %1281 = vmatprep.mubr.f32.mxu0 0.0
        %1282 = vmatmul.mubr.f32.gmra.mxu0 %v1132
        %v1283 = vpop.f32.mrf.mxu0
        %v1284 = vadd.f32 0.0, %v1283
        %v1285 = vpop.f32.mrf.mxu0
        %1286 = vdwg.mxu0
        %v1287 = vmul.f32 %v1279, %v1209
        %v1288 = vmul.f32 %v1284, %v1209
        %v1289 = vmul.f32 %v1210, %v1210
        %v1290 = vmul.f32 %v1211, %v1211
        %v1291 = vsub.f32 %v1287, %v1289
        %v1292 = vsub.f32 %v1288, %v1290
        %v1293 = vmax.f32 %v1291, 0.0
        %v1294 = vmax.f32 %v1292, 0.0
        %v1295 = vadd.f32 %v1293, 1e-05
        %v1296 = vadd.f32 %v1294, 1e-05
        %v1297 = vrsqrt.pop %v1295
        %v1298 = vrsqrt.pop %v1296
        %1300 = vset.pattern.permute.xlu0 0
        %1301 = vperm.xlu0 %1300, %v1210
        %v1302 = vpop.permute.xlu0 %1301
        %1305 = vset.pattern.permute.xlu0 0
        %1306 = vperm.xlu0 %1305, %v1211
        %v1307 = vpop.permute.xlu0 %1306
        %v1309 = vsub.f32 %v861, %v1302
        %v1310 = vsub.f32 %v863, %v1302
        %v1311 = vsub.f32 %v904, %v1302
        %v1312 = vsub.f32 %v865, %v1307
        %v1313 = vsub.f32 %v867, %v1307
        %v1314 = vsub.f32 %v907, %v1307
        %1316 = vset.pattern.permute.xlu0 0
        %1317 = vperm.xlu0 %1316, %v1297
        %v1318 = vpop.permute.xlu0 %1317
        %1321 = vset.pattern.permute.xlu0 0
        %1322 = vperm.xlu0 %1321, %v1298
        %v1323 = vpop.permute.xlu0 %1322
        %v1325 = vmul.f32 %v1309, %v1318
        %v1326 = vmul.f32 %v1310, %v1318
        %v1327 = vmul.f32 %v1311, %v1318
        %v1328 = vmul.f32 %v1312, %v1323
        %v1329 = vmul.f32 %v1313, %v1323
        %v1330 = vmul.f32 %v1314, %v1323
        %v1331 = vld [vmem:[%s3] sm:$0xff]
        %v1332 = vld [vmem:[%s3 + $0x8] sm:$0xff]
        %1334 = vset.pattern.permute.xlu0 0
        %1335 = vperm.xlu0 %1334, %v1331
        %v1336 = vpop.permute.xlu0 %1335
        %1339 = vset.pattern.permute.xlu0 0
        %1340 = vperm.xlu0 %1339, %v1332
        %v1341 = vpop.permute.xlu0 %1340
        %v1343 = vmul.f32 %v1325, %v1336
        %v1344 = vmul.f32 %v1326, %v1336
        %v1345 = vmul.f32 %v1327, %v1336
        %v1346 = vmul.f32 %v1328, %v1341
        %v1347 = vmul.f32 %v1329, %v1341
        %v1348 = vmul.f32 %v1330, %v1341
        %v1349 = vld [vmem:[%s4] sm:$0xff]
        %v1350 = vld [vmem:[%s4 + $0x8] sm:$0xff]
        %1352 = vset.pattern.permute.xlu0 0
        %1353 = vperm.xlu0 %1352, %v1349
        %v1354 = vpop.permute.xlu0 %1353
        %1357 = vset.pattern.permute.xlu0 0
        %1358 = vperm.xlu0 %1357, %v1350
        %v1359 = vpop.permute.xlu0 %1358
        %v1361 = vadd.f32 %v1343, %v1354
        %v1362 = vadd.f32 %v1344, %v1354
        %v1363 = vadd.f32 %v1345, %v1354
        %v1364 = vadd.f32 %v1346, %v1359
        %v1365 = vadd.f32 %v1347, %v1359
        %v1366 = vadd.f32 %v1348, %v1359
        %v1367 = vld [vmem:[%s338] sm:$0xff]
        %v1368 = vld [vmem:[%s338 + $0x8] sm:$0xff]
        %v1369 = vadd.f32 %v1367, 1.0
        %v1370 = vadd.f32 %v1368, 1.0
        %1372 = vset.pattern.permute.xlu0 0
        %1373 = vperm.xlu0 %1372, %v1369
        %v1374 = vpop.permute.xlu0 %1373
        %1377 = vset.pattern.permute.xlu0 0
        %1378 = vperm.xlu0 %1377, %v1370
        %v1379 = vpop.permute.xlu0 %1378
        %v1381 = vmul.f32 %v1361, %v1374
        %v1382 = vmul.f32 %v1362, %v1374
        %v1383 = vmul.f32 %v1363, %v1374
        %v1384 = vmul.f32 %v1364, %v1379
        %v1385 = vmul.f32 %v1365, %v1379
        %v1386 = vmul.f32 %v1366, %v1379
        %v1387 = vld [vmem:[%s343] sm:$0xff]
        %v1388 = vld [vmem:[%s343 + $0x8] sm:$0xff]
        %1390 = vset.pattern.permute.xlu0 0
        %1391 = vperm.xlu0 %1390, %v1387
        %v1392 = vpop.permute.xlu0 %1391
        %1395 = vset.pattern.permute.xlu0 0
        %1396 = vperm.xlu0 %1395, %v1388
        %v1397 = vpop.permute.xlu0 %1396
        %v1399 = vadd.f32 %v1381, %v1392
        %v1400 = vadd.f32 %v1382, %v1392
        %v1401 = vadd.f32 %v1383, %v1392
        %v1402 = vadd.f32 %v1384, %v1397
        %v1403 = vadd.f32 %v1385, %v1397
        %v1404 = vadd.f32 %v1386, %v1397
        %v1405 = vxor.u32 %v1399, 2147483648
        %v1406 = vxor.u32 %v1400, 2147483648
        %v1407 = vxor.u32 %v1401, 2147483648
        %v1408 = vxor.u32 %v1402, 2147483648
        %v1409 = vxor.u32 %v1403, 2147483648
        %v1410 = vxor.u32 %v1404, 2147483648
        %v1411 = vmul.f32 %v1405, 1.442695
        %v1412 = vpow.pop %v1411
        %v1413 = vmul.f32 %v1406, 1.442695
        %v1414 = vpow.pop %v1413
        %v1415 = vmul.f32 %v1407, 1.442695
        %v1416 = vpow.pop %v1415
        %v1417 = vmul.f32 %v1408, 1.442695
        %v1418 = vpow.pop %v1417
        %v1419 = vmul.f32 %v1409, 1.442695
        %v1420 = vpow.pop %v1419
        %v1421 = vmul.f32 %v1410, 1.442695
        %v1422 = vpow.pop %v1421
        %v1423 = vadd.f32 %v1412, 1.0
        %v1424 = vadd.f32 %v1414, 1.0
        %v1425 = vadd.f32 %v1416, 1.0
        %v1426 = vadd.f32 %v1418, 1.0
        %v1427 = vadd.f32 %v1420, 1.0
        %v1428 = vadd.f32 %v1422, 1.0
        %v1429 = vrcp.pop %v1423
        %v1430 = vmul.f32 1.0, %v1429
        %v1431 = vrcp.pop %v1424
        %v1432 = vmul.f32 1.0, %v1431
        %v1433 = vrcp.pop %v1425
        %v1434 = vmul.f32 1.0, %v1433
        %v1435 = vrcp.pop %v1426
        %v1436 = vmul.f32 1.0, %v1435
        %v1437 = vrcp.pop %v1427
        %v1438 = vmul.f32 1.0, %v1437
        %v1439 = vrcp.pop %v1428
        %v1440 = vmul.f32 1.0, %v1439
        %v1441 = vmul.f32 %v1399, %v1430
        %v1442 = vmul.f32 %v1400, %v1432
        %v1443 = vmul.f32 %v1401, %v1434
        %v1444 = vmul.f32 %v1402, %v1436
        %v1445 = vmul.f32 %v1403, %v1438
        %v1446 = vmul.f32 %v1404, %v1440
        %v1447 = vpack.c.bf16 %v1444, %v1441
        %v1448 = vpack.c.bf16 %v1445, %v1442
        %v1449 = vpack.c.bf16 %v1446, %v1443
        %v1453 = vunpack.c.l.b16 %v1447
        %v1454 = vunpack.c.l.b16 %v1448
        %v1455 = vunpack.c.l.b16 %v1449
        %v1456 = vunpack.c.h.b16 %v1447
        %v1457 = vunpack.c.h.b16 %v1448
        %v1458 = vunpack.c.h.b16 %v1449
        %v1459 = vpack.c.b16 %v1454, %v1453
        %v1460 = vpack.c.b16 %v1455, %v1455
        %v1461 = vpack.c.b16 %v1457, %v1456
        %v1462 = vpack.c.b16 %v1458, %v1458
        %1467 = vst [vmem:[%s328] sm:$0xff] %v1459
        %1468 = vst.msk [vmem:[%s328 + $0x8] sm:$0xf] %vm350, %v1460
        %1469 = vst [vmem:[%s328 + $0xc] sm:$0xff] %v1461
        %1470 = vst.msk [vmem:[%s328 + $0x14] sm:$0xf] %vm350, %v1462
        %s1471 = sand.u32 %s213, 1
        %s1472 = scalar_lea.sflag [#allocation4], %s1471
        %s1473 = sand.u32 %s213, 1
        %s1474 = smul.addr %s1473, 24
        %s1475 = scalar_lea.vmem [#allocation3], %s1474
        // Predicated region
        $region53: #{tpu_custom_call.1} parent=51 // pred_check
          %p1476 = pneg %p223
        $region54: #{tpu_custom_call.1} parent=51 // pred_check_branch
          %1478 = sbr.rel (%p1476) target = $region56
        $region55: #{tpu_custom_call.1} parent=51 // pred_region
          %s1480 = ssub.s32 384, 384
          %1481 = vsyncadd %s1472, %s1480
          %s1482 = smul.addr %s22, 6
          %s1483 = smul.addr %s1482, 64
          %s1484 = scalar_lea.hbm %s8, %s1483
          %s1485 = sshll.u32 %s1475, 4
          %s1486 = int_to_ptr.vmem [resolvable:$true] %s1485
          %1491 = dma.vmem_to_hbm [thread:$0]  %s1486, 384, %s1484, %s1472, 192, 192, 12
        $region56: #{tpu_custom_call.1} parent=51 // pred_fallthru
          _
      $region52: #{tpu_custom_call.1} parent=5 // pred_fallthru
        _
      %p1492 = scmp.le.s32.totalorder 2, %s17
      // Predicated region
      $region57: #{tpu_custom_call.1} parent=5 // pred_check
        %p1493 = pneg %p1492
      $region58: #{tpu_custom_call.1} parent=5 // pred_check_branch
        %1495 = sbr.rel (%p1493) target = $region60
      $region59: #{tpu_custom_call.1} parent=5 // pred_region
        %s1496 = ssub.s32 %s17, 2
        // Predicated region
        $region61: #{tpu_custom_call.1} parent=59 // pred_check
          %p1497 = pneg %p229
        $region62: #{tpu_custom_call.1} parent=59 // pred_check_branch
          %1499 = sbr.rel (%p1497) target = $region64
        $region63: #{tpu_custom_call.1} parent=59 // pred_region
          %s1500 = sand.u32 %s214, 1
          %s1501 = scalar_lea.sflag [#allocation4], %s1500
          %s1502 = sand.u32 %s214, 1
          %s1503 = smul.addr %s1502, 24
          %s1504 = scalar_lea.vmem [#allocation3], %s1503
          %1505 = dma.done %s1501, 384
        $region64: #{tpu_custom_call.1} parent=59 // pred_fallthru
          _
      $region60: #{tpu_custom_call.1} parent=5 // pred_fallthru
        _
    $region6: #{tpu_custom_call.1} parent=1 // loop_footer
      %s21 = sadd.s32 1, %s17
    $region7: #{tpu_custom_call.1} parent=1 // loop_footer_branch
      %16 = sbr.rel target = $region3
    $region8: #{tpu_custom_call.1} parent=1 // loop_exit
      _
    %1506 = vsyncpa [#allocation4], 1
    %s1507 = scalar_lea.sflag [#allocation4], 1
    %1508 = vsyncpa %s1507, 1

</llo_original>
